<compile_context>
chip_gen: v5e
topology: v5e:2x2
jax: 0.10.0
libtpu: 0.0.40
codegen_flags: <defaults>
</compile_context>

<pallas_src>
import jax
import jax.numpy as jnp
from jax.experimental import pallas as pl
from jax.experimental.pallas import tpu as pltpu


HIDDEN1 = 1024
HIDDEN2 = 516          # logical width, matches nn.Linear(1024, 516)
HIDDEN2_PAD = 640      # 516 rounded up to a multiple of 128 (lane width)

BATCH_TILE = 512       # batch tile for the grid (large-batch) path
VMEM_LIMIT = 32 << 20  # 32 MiB scoped VMEM


def qnetwork_kernel(x_ref, w1_ref, b1_ref, w2q_ref, w2s_ref, b2_ref,
                    w3_ref, b3_ref, out_ref):
    # fc1 + ReLU  (x cast to bf16 in-kernel, f32 MXU accumulation, f32 epilogue).
    x = x_ref[...].astype(jnp.bfloat16)
    h1 = jnp.dot(x, w1_ref[...], preferred_element_type=jnp.float32)
    h1 = jnp.maximum(h1 + b1_ref[...], 0.0)

    # fc2 + ReLU.  w2 is int8: dequantize to bf16 (integers <= 127 are exact in bf16);
    # the per-output-channel scale factors out of the dot and is applied in f32.
    w2 = w2q_ref[...].astype(jnp.float32).astype(jnp.bfloat16)
    h2 = jnp.dot(h1.astype(jnp.bfloat16), w2, preferred_element_type=jnp.float32)
    h2 = jnp.maximum(h2 * w2s_ref[...] + b2_ref[...], 0.0)

    # fc3 (no activation).
    out = jnp.dot(h2.astype(jnp.bfloat16), w3_ref[...],
                  preferred_element_type=jnp.float32)
    out_ref[...] = (out + b3_ref[...]).astype(out_ref.dtype)


def _param_list(params):
    return [params[k] for k in ("w1", "b1", "w2q", "w2s", "b2", "w3", "b3")]


def _cost_estimate(B, in_dim, out_dim, params):
    flops = 2 * B * (in_dim * HIDDEN1 + HIDDEN1 * HIDDEN2_PAD + HIDDEN2_PAD * out_dim)
    weight_bytes = sum(int(v.size) * v.dtype.itemsize for v in params.values())
    bytes_accessed = weight_bytes + B * in_dim * 4 + B * out_dim * 4
    return pl.CostEstimate(flops=int(flops), transcendentals=0,
                           bytes_accessed=int(bytes_accessed))


def qnetwork_forward(x, params):
    """x: (B, input_dim) float32.  params: dict from init_params."""
    B, in_dim = x.shape
    out_dim = params["w3"].shape[1]
    args = _param_list(params)
    cost = _cost_estimate(B, in_dim, out_dim, params)

    if B <= BATCH_TILE:
        # Single full-block invocation: everything fits easily in VMEM; extra grid steps
        # would be pure per-step overhead at this size, and splitting across v7x's cores
        # would duplicate the dominant weight DMA.
        # TODO(synk): for repeated tiny-batch RL rollouts the weights are re-fetched every
        # call; batching timesteps into one call or a cross-call prefetch (semaphore+VMEM
        # outputs consumed by the next call) would keep them resident.
        return pl.pallas_call(
            qnetwork_kernel,
            out_shape=jax.ShapeDtypeStruct((B, out_dim), jnp.float32),
            compiler_params=pltpu.CompilerParams(vmem_limit_bytes=VMEM_LIMIT),
            cost_estimate=cost,
        )(x, *args)

    # Large batch: tile the batch axis (ragged last block is fine — Pallas masks the OOB
    # writeback) and mark it parallel so v7x's two TensorCores split the rows.  Weights /
    # biases / scales have constant block indices -> single-buffered (no dead double buffer).
    n_tiles = pl.cdiv(B, BATCH_TILE)
    resident = lambda a: pl.BlockSpec(a.shape, lambda i: (0,) * a.ndim,
                                      pipeline_mode=pl.Buffered(1))
    return pl.pallas_call(
        qnetwork_kernel,
        out_shape=jax.ShapeDtypeStruct((B, out_dim), jnp.float32),
        grid=(n_tiles,),
        in_specs=[pl.BlockSpec((BATCH_TILE, in_dim), lambda i: (i, 0))]
                 + [resident(a) for a in args],
        out_specs=pl.BlockSpec((BATCH_TILE, out_dim), lambda i: (i, 0)),
        compiler_params=pltpu.CompilerParams(
            dimension_semantics=("parallel",),
            vmem_limit_bytes=VMEM_LIMIT,
        ),
        cost_estimate=cost,
    )(x, *args)


def init_params(key, input_dim, output_dim):
    """Mirrors nn.Linear default init (uniform +/- 1/sqrt(fan_in)).  Weights stored as
    (in, out) = transpose of PyTorch's (out, in).  w1/w3 are bf16; w2 (dominant HBM
    transfer) is int8 with per-output-channel f32 scales; biases/scales stay f32.  The
    516-wide layer is zero-padded to 640 lanes (padded b2/w2 columns and w3 rows stay
    exactly zero, so the math is unchanged)."""
    ks = jax.random.split(key, 6)

    def linear(kw, kb, fan_in, fan_out):
        bound = 1.0 / jnp.sqrt(jnp.float32(fan_in))
        w = jax.random.uniform(kw, (fan_in, fan_out), jnp.float32, -bound, bound)
        b = jax.random.uniform(kb, (1, fan_out), jnp.float32, -bound, bound)
        return w, b

    w1, b1 = linear(ks[0], ks[1], input_dim, HIDDEN1)
    w2, b2 = linear(ks[2], ks[3], HIDDEN1, HIDDEN2)
    w3, b3 = linear(ks[4], ks[5], HIDDEN2, output_dim)

    pad = HIDDEN2_PAD - HIDDEN2
    w2 = jnp.pad(w2, ((0, 0), (0, pad)))   # zero output columns -> relu(0)=0
    b2 = jnp.pad(b2, ((0, 0), (0, pad)))
    w3 = jnp.pad(w3, ((0, pad), (0, 0)))   # zero rows -> contribute nothing

    # Symmetric per-output-channel int8 quantization of w2.
    amax = jnp.max(jnp.abs(w2), axis=0, keepdims=True)
    w2s = jnp.where(amax > 0, amax / 127.0, 1.0).astype(jnp.float32)
    w2q = jnp.clip(jnp.round(w2 / w2s), -127.0, 127.0).astype(jnp.int8)

    # TODO(synk): a native int8 (v5e/v6e) / fp8-e4m3 (v7x) MXU path (with activation
    # quantization) would also cut compute-side bytes; dequant-to-bf16 keeps one portable
    # kernel while still halving the dominant w2 HBM transfer.
    return {
        "w1": w1.astype(jnp.bfloat16), "b1": b1,
        "w2q": w2q, "w2s": w2s, "b2": b2,
        "w3": w3.astype(jnp.bfloat16), "b3": b3,
    }


def reference_forward(x, p):
    """Pure-JAX reference using the identical bf16 / int8-dequant recipe as the kernel."""
    xb = x.astype(jnp.bfloat16)
    h1 = jnp.dot(xb, p["w1"], preferred_element_type=jnp.float32) + p["b1"]
    h1 = jnp.maximum(h1, 0.0)
    w2 = p["w2q"].astype(jnp.float32).astype(jnp.bfloat16)
    h2 = jnp.dot(h1.astype(jnp.bfloat16), w2, preferred_element_type=jnp.float32)
    h2 = jnp.maximum(h2 * p["w2s"] + p["b2"], 0.0)
    return jnp.dot(h2.astype(jnp.bfloat16), p["w3"],
                   preferred_element_type=jnp.float32) + p["b3"]


if __name__ == "__main__":
    key = jax.random.PRNGKey(0)
    k_x, k_p, k_big = jax.random.split(key, 3)

    batch = 8
    input_dim = 32    # e.g. state/observation dim of the trading agent
    output_dim = 4    # e.g. number of actions

    x = jax.random.normal(k_x, (batch, input_dim), jnp.float32)
    params = init_params(k_p, input_dim, output_dim)

    # Small-batch (single full-block) path.
    out = qnetwork_forward(x, params)
    jax.block_until_ready(out)
    ref = reference_forward(x, params)
    assert out.shape == (batch, output_dim)
    assert jnp.allclose(out, ref, atol=1e-2, rtol=1e-2), "mismatch vs reference (small)"

    # Large-batch (batch-parallel grid, ragged last block) path.
    x_big = jax.random.normal(k_big, (600, input_dim), jnp.float32)
    out_big = qnetwork_forward(x_big, params)
    jax.block_until_ready(out_big)
    ref_big = reference_forward(x_big, params)
    assert out_big.shape == (600, output_dim)
    assert jnp.allclose(out_big, ref_big, atol=1e-2, rtol=1e-2), "mismatch vs reference (big)"

    print("KERNEL_OK")
</pallas_src>

<mosaic_0001>
module attributes {stable_mosaic.version = 11 : i64} {
  func.func @qnetwork_kernel(%arg0: memref<8x32xf32, #tpu.memory_space<vmem>>, %arg1: memref<32x1024xbf16, #tpu.memory_space<vmem>>, %arg2: memref<1x1024xf32, #tpu.memory_space<vmem>>, %arg3: memref<1024x640xi8, #tpu.memory_space<vmem>>, %arg4: memref<1x640xf32, #tpu.memory_space<vmem>>, %arg5: memref<1x640xf32, #tpu.memory_space<vmem>>, %arg6: memref<640x4xbf16, #tpu.memory_space<vmem>>, %arg7: memref<1x4xf32, #tpu.memory_space<vmem>>, %arg8: memref<8x4xf32, #tpu.memory_space<vmem>>) attributes {dimension_semantics = [], scalar_prefetch = 0 : i64, scratch_operands = 0 : i64, tpu.core_type = #tpu.core_type<tc>} {
    %c0 = arith.constant 0 : index
    %c0_0 = arith.constant 0 : index
    %0 = vector.load %arg0[%c0, %c0_0] : memref<8x32xf32, #tpu.memory_space<vmem>>, vector<8x32xf32>
    %1 = arith.truncf %0 : vector<8x32xf32> to vector<8x32xbf16>
    %c0_1 = arith.constant 0 : index
    %c0_2 = arith.constant 0 : index
    %2 = vector.load %arg1[%c0_1, %c0_2] : memref<32x1024xbf16, #tpu.memory_space<vmem>>, vector<32x1024xbf16>
    %cst = arith.constant dense<0.000000e+00> : vector<8x1024xf32>
    %3 = tpu.matmul %1, %2, %cst {dimension_numbers = #tpu.dot_dimension_numbers<[1], [0], [0], [1], [0, 0, 1, 1], [], []>} : vector<8x32xbf16>, vector<32x1024xbf16>, vector<8x1024xf32> -> vector<8x1024xf32>
    %c0_3 = arith.constant 0 : index
    %c0_4 = arith.constant 0 : index
    %4 = vector.load %arg2[%c0_3, %c0_4] : memref<1x1024xf32, #tpu.memory_space<vmem>>, vector<1x1024xf32>
    %5 = vector.broadcast %4 : vector<1x1024xf32> to vector<8x1024xf32>
    %6 = arith.addf %3, %5 : vector<8x1024xf32>
    %cst_5 = arith.constant 0.000000e+00 : f32
    %7 = vector.broadcast %cst_5 : f32 to vector<8x1024xf32>
    %8 = arith.maximumf %6, %7 : vector<8x1024xf32>
    %c0_6 = arith.constant 0 : index
    %c0_7 = arith.constant 0 : index
    %9 = vector.load %arg3[%c0_6, %c0_7] : memref<1024x640xi8, #tpu.memory_space<vmem>>, vector<1024x640xi8>
    %10 = arith.sitofp %9 : vector<1024x640xi8> to vector<1024x640xf32>
    %11 = arith.truncf %10 : vector<1024x640xf32> to vector<1024x640xbf16>
    %12 = arith.truncf %8 : vector<8x1024xf32> to vector<8x1024xbf16>
    %cst_8 = arith.constant dense<0.000000e+00> : vector<8x640xf32>
    %13 = tpu.matmul %12, %11, %cst_8 {dimension_numbers = #tpu.dot_dimension_numbers<[1], [0], [0], [1], [0, 0, 1, 1], [], []>} : vector<8x1024xbf16>, vector<1024x640xbf16>, vector<8x640xf32> -> vector<8x640xf32>
    %c0_9 = arith.constant 0 : index
    %c0_10 = arith.constant 0 : index
    %14 = vector.load %arg4[%c0_9, %c0_10] : memref<1x640xf32, #tpu.memory_space<vmem>>, vector<1x640xf32>
    %15 = vector.broadcast %14 : vector<1x640xf32> to vector<8x640xf32>
    %16 = arith.mulf %13, %15 : vector<8x640xf32>
    %c0_11 = arith.constant 0 : index
    %c0_12 = arith.constant 0 : index
    %17 = vector.load %arg5[%c0_11, %c0_12] : memref<1x640xf32, #tpu.memory_space<vmem>>, vector<1x640xf32>
    %18 = vector.broadcast %17 : vector<1x640xf32> to vector<8x640xf32>
    %19 = arith.addf %16, %18 : vector<8x640xf32>
    %cst_13 = arith.constant 0.000000e+00 : f32
    %20 = vector.broadcast %cst_13 : f32 to vector<8x640xf32>
    %21 = arith.maximumf %19, %20 : vector<8x640xf32>
    %22 = arith.truncf %21 : vector<8x640xf32> to vector<8x640xbf16>
    %c0_14 = arith.constant 0 : index
    %c0_15 = arith.constant 0 : index
    %23 = vector.load %arg6[%c0_14, %c0_15] : memref<640x4xbf16, #tpu.memory_space<vmem>>, vector<640x4xbf16>
    %cst_16 = arith.constant dense<0.000000e+00> : vector<8x4xf32>
    %24 = tpu.matmul %22, %23, %cst_16 {dimension_numbers = #tpu.dot_dimension_numbers<[1], [0], [0], [1], [0, 0, 1, 1], [], []>} : vector<8x640xbf16>, vector<640x4xbf16>, vector<8x4xf32> -> vector<8x4xf32>
    %c0_17 = arith.constant 0 : index
    %c0_18 = arith.constant 0 : index
    %25 = vector.load %arg7[%c0_17, %c0_18] : memref<1x4xf32, #tpu.memory_space<vmem>>, vector<1x4xf32>
    %26 = vector.broadcast %25 : vector<1x4xf32> to vector<8x4xf32>
    %27 = arith.addf %24, %26 : vector<8x4xf32>
    %c0_19 = arith.constant 0 : index
    %c0_20 = arith.constant 0 : index
    %28 = vector.load %arg8[%c0_19, %c0_20] : memref<8x4xf32, #tpu.memory_space<vmem>>, vector<8x4xf32>
    tpu.vector_store %arg8[%c0_19, %c0_20], %27 {strides = array<i32>} : memref<8x4xf32, #tpu.memory_space<vmem>>, vector<8x4xf32>,
    return
  }
}

</mosaic_0001>

<llo_original>
// kernel: tpu_custom_call.1
$region0: #{tpu_custom_call.1}
  #allocation0 [shape = 'u32[]', space=smem, size = 0x4, offset = 0x4, fixed_abs, tag = 'smem constant byte address 0x4 - core index']
  #allocation1 [shape = 'u32[72,128]{1,0:T(1,128)}', space=vmem, size = 0x9000, scoped, tag = 'internal scratch']
  %s0 = inlined_call_operand.vmem [shape: f32[8,32], index: 0, kind: input, shape index: {}]
  %s1 = inlined_call_operand.vmem [shape: bf16[32,1024], index: 1, kind: input, shape index: {}]
  %s2 = inlined_call_operand.vmem [shape: f32[1,1024], index: 2, kind: input, shape index: {}]
  %s3 = inlined_call_operand.hbm [shape: s8[1024,640], index: 3, kind: input, shape index: {}]
  %s4 = inlined_call_operand.vmem [shape: f32[1,640], index: 4, kind: input, shape index: {}]
  %s5 = inlined_call_operand.vmem [shape: f32[1,640], index: 5, kind: input, shape index: {}]
  %s6 = inlined_call_operand.vmem [shape: bf16[640,4], index: 6, kind: input, shape index: {}]
  %s7 = inlined_call_operand.vmem [shape: f32[1,4], index: 7, kind: input, shape index: {}]
  %s8 = inlined_call_operand.vmem [shape: f32[8,4], index: 8, kind: output, shape index: {}]
  %s9 = sld [smem:[#allocation0]]
  $region46: #{tpu_custom_call.1} parent=0
    _
  %s11 = ssub.s32 1, %s9
  %s12 = scalar_select 0, %s11, %s9
  $region1: #{tpu_custom_call.1} parent=0
    #allocation2 [shape = 'u8[655360]{0}', space=vmem, size = 0xa0000, scoped, tag = 'input window, operand 3, single buffered']
    #allocation3 [shape = 's32[1]{0}', space=sflag, size = 0x4, scoped, tag = 'scoped memory for tpu_custom_call.1']
    %13 = vsyncpa [#allocation3], 0
    // Predicated region
    $region2: #{tpu_custom_call.1} parent=1 // pred_check
      _
    $region3: #{tpu_custom_call.1} parent=1 // pred_check_branch
      %15 = sbr.rel (0) target = $region5
    $region4: #{tpu_custom_call.1} parent=1 // pred_region
      _
    $region5: #{tpu_custom_call.1} parent=1 // pred_fallthru
      _
    // Predicated region
    $region6: #{tpu_custom_call.1} parent=1 // pred_check
      _
    $region7: #{tpu_custom_call.1} parent=1 // pred_check_branch
      %17 = sbr.rel (0) target = $region9
    $region8: #{tpu_custom_call.1} parent=1 // pred_region
      _
    $region9: #{tpu_custom_call.1} parent=1 // pred_fallthru
      _
    // Predicated region
    $region10: #{tpu_custom_call.1} parent=1 // pred_check
      _
    $region11: #{tpu_custom_call.1} parent=1 // pred_check_branch
      %19 = sbr.rel (0) target = $region13
    $region12: #{tpu_custom_call.1} parent=1 // pred_region
      _
    $region13: #{tpu_custom_call.1} parent=1 // pred_fallthru
      _
    // Predicated region
    $region14: #{tpu_custom_call.1} parent=1 // pred_check
      _
    $region15: #{tpu_custom_call.1} parent=1 // pred_check_branch
      %21 = sbr.rel (0) target = $region17
    $region16: #{tpu_custom_call.1} parent=1 // pred_region
      %23 = vsyncadd [#allocation3], 0
      %s24 = sshll.u32 %s3, 4
      %s25 = int_to_ptr.hbm [resolvable:$true] %s24
      %s26 = sshll.u32 [#allocation2], 4
      %s27 = int_to_ptr.vmem [resolvable:$true] %s26
      %32 = dma.hbm_to_vmem [thread:$0]  %s25, 20480, %s27, [#allocation3], 640, 640, 40
    $region17: #{tpu_custom_call.1} parent=1 // pred_fallthru
      _
    // Predicated region
    $region18: #{tpu_custom_call.1} parent=1 // pred_check
      _
    $region19: #{tpu_custom_call.1} parent=1 // pred_check_branch
      %34 = sbr.rel (0) target = $region21
    $region20: #{tpu_custom_call.1} parent=1 // pred_region
      _
    $region21: #{tpu_custom_call.1} parent=1 // pred_fallthru
      _
    // Predicated region
    $region22: #{tpu_custom_call.1} parent=1 // pred_check
      _
    $region23: #{tpu_custom_call.1} parent=1 // pred_check_branch
      %36 = sbr.rel (0) target = $region25
    $region24: #{tpu_custom_call.1} parent=1 // pred_region
      _
    $region25: #{tpu_custom_call.1} parent=1 // pred_fallthru
      _
    // Predicated region
    $region26: #{tpu_custom_call.1} parent=1 // pred_check
      _
    $region27: #{tpu_custom_call.1} parent=1 // pred_check_branch
      %38 = sbr.rel (0) target = $region29
    $region28: #{tpu_custom_call.1} parent=1 // pred_region
      _
    $region29: #{tpu_custom_call.1} parent=1 // pred_fallthru
      _
    // Predicated region
    $region30: #{tpu_custom_call.1} parent=1 // pred_check
      _
    $region31: #{tpu_custom_call.1} parent=1 // pred_check_branch
      %40 = sbr.rel (0) target = $region33
    $region32: #{tpu_custom_call.1} parent=1 // pred_region
      _
    $region33: #{tpu_custom_call.1} parent=1 // pred_fallthru
      _
    // Predicated region
    $region34: #{tpu_custom_call.1} parent=1 // pred_check
      _
    $region35: #{tpu_custom_call.1} parent=1 // pred_check_branch
      %42 = sbr.rel (0) target = $region37
    $region36: #{tpu_custom_call.1} parent=1 // pred_region
      %44 = dma.done [#allocation3], 20480
    $region37: #{tpu_custom_call.1} parent=1 // pred_fallthru
      _
    %v46 = vld [vmem:[%s0] sm:$0xff]
    %v47 = vpack.c.bf16 %v46, %v46
    %v48 = vld [vmem:[%s1] sm:$0xff]
    %v49 = vld [vmem:[%s1 + $0x8] sm:$0xff]
    %v50 = vld [vmem:[%s1 + $0x10] sm:$0xff]
    %v51 = vld [vmem:[%s1 + $0x18] sm:$0xff]
    %v52 = vld [vmem:[%s1 + $0x20] sm:$0xff]
    %v53 = vld [vmem:[%s1 + $0x28] sm:$0xff]
    %v54 = vld [vmem:[%s1 + $0x30] sm:$0xff]
    %v55 = vld [vmem:[%s1 + $0x38] sm:$0xff]
    %v56 = vld [vmem:[%s1 + $0x40] sm:$0xff]
    %v57 = vld [vmem:[%s1 + $0x48] sm:$0xff]
    %v58 = vld [vmem:[%s1 + $0x50] sm:$0xff]
    %v59 = vld [vmem:[%s1 + $0x58] sm:$0xff]
    %v60 = vld [vmem:[%s1 + $0x60] sm:$0xff]
    %v61 = vld [vmem:[%s1 + $0x68] sm:$0xff]
    %v62 = vld [vmem:[%s1 + $0x70] sm:$0xff]
    %v63 = vld [vmem:[%s1 + $0x78] sm:$0xff]
    %v64 = vld [vmem:[%s2] sm:$0xff]
    %v66 = vperm.slane %v64, 0
    %v67 = vperm.slane %v64, 1
    %v68 = vperm.slane %v64, 2
    %v69 = vperm.slane %v64, 3
    %v70 = vperm.slane %v64, 4
    %v71 = vperm.slane %v64, 5
    %v72 = vperm.slane %v64, 6
    %v73 = vperm.slane %v64, 7
    %v98 = vunpack.c.l.b16 %v48
    %v99 = vunpack.c.h.b16 %v48
    %v100 = vunpack.c.l.b16 %v49
    %v101 = vunpack.c.h.b16 %v49
    %v102 = vunpack.c.l.b16 %v50
    %v103 = vunpack.c.h.b16 %v50
    %v104 = vunpack.c.l.b16 %v51
    %v105 = vunpack.c.h.b16 %v51
    %v106 = vunpack.c.l.b16 %v52
    %v107 = vunpack.c.h.b16 %v52
    %v108 = vunpack.c.l.b16 %v53
    %v109 = vunpack.c.h.b16 %v53
    %v110 = vunpack.c.l.b16 %v54
    %v111 = vunpack.c.h.b16 %v54
    %v112 = vunpack.c.l.b16 %v55
    %v113 = vunpack.c.h.b16 %v55
    %v114 = vunpack.c.l.b16 %v56
    %v115 = vunpack.c.h.b16 %v56
    %v116 = vunpack.c.l.b16 %v57
    %v117 = vunpack.c.h.b16 %v57
    %v118 = vunpack.c.l.b16 %v58
    %v119 = vunpack.c.h.b16 %v58
    %v120 = vunpack.c.l.b16 %v59
    %v121 = vunpack.c.h.b16 %v59
    %v122 = vunpack.c.l.b16 %v60
    %v123 = vunpack.c.h.b16 %v60
    %v124 = vunpack.c.l.b16 %v61
    %v125 = vunpack.c.h.b16 %v61
    %v126 = vunpack.c.l.b16 %v62
    %v127 = vunpack.c.h.b16 %v62
    %v128 = vunpack.c.l.b16 %v63
    %v129 = vunpack.c.h.b16 %v63
    %v130 = vpack.c.b16 %v106, %v98
    %v131 = vpack.c.b16 %v107, %v99
    %v132 = vpack.c.b16 %v108, %v100
    %v133 = vpack.c.b16 %v109, %v101
    %v134 = vpack.c.b16 %v110, %v102
    %v135 = vpack.c.b16 %v111, %v103
    %v136 = vpack.c.b16 %v112, %v104
    %v137 = vpack.c.b16 %v113, %v105
    %v138 = vpack.c.b16 %v122, %v114
    %v139 = vpack.c.b16 %v123, %v115
    %v140 = vpack.c.b16 %v124, %v116
    %v141 = vpack.c.b16 %v125, %v117
    %v142 = vpack.c.b16 %v126, %v118
    %v143 = vpack.c.b16 %v127, %v119
    %v144 = vpack.c.b16 %v128, %v120
    %v145 = vpack.c.b16 %v129, %v121
    %vm162 = vcmask 261120
    %v164 = vsel %vm162, %v47, 0
    %166 = vmatpush.bf16.msra.mxu0 0
    %167 = vmatpush.bf16.msra.mxu0 0
    %168 = vmatpush.bf16.msra.mxu0 0
    %169 = vmatpush.bf16.msra.mxu0 0
    %170 = vmatpush.bf16.msra.mxu0 0
    %171 = vmatpush.bf16.msra.mxu0 0
    %172 = vmatpush.bf16.msra.mxu0 %v138
    %173 = vmatpush.bf16.msra.mxu0 %v130
    %174 = vmatmul.bf16.gmra.mxu0 %v164
    %v175 = vpop.f32.mrf.mxu0
    %v176 = vadd.f32 %v66, %v175
    %v177 = vpop.f32.mrf.mxu0
    %178 = vdwg.mxu0
    %179 = vmatpush.bf16.msra.mxu0 0
    %180 = vmatpush.bf16.msra.mxu0 0
    %181 = vmatpush.bf16.msra.mxu0 0
    %182 = vmatpush.bf16.msra.mxu0 0
    %183 = vmatpush.bf16.msra.mxu0 0
    %184 = vmatpush.bf16.msra.mxu0 0
    %185 = vmatpush.bf16.msra.mxu0 %v139
    %186 = vmatpush.bf16.msra.mxu0 %v131
    %187 = vmatmul.bf16.gmra.mxu0 %v164
    %v188 = vpop.f32.mrf.mxu0
    %v189 = vadd.f32 %v67, %v188
    %v190 = vpop.f32.mrf.mxu0
    %191 = vdwg.mxu0
    %192 = vmatpush.bf16.msra.mxu0 0
    %193 = vmatpush.bf16.msra.mxu0 0
    %194 = vmatpush.bf16.msra.mxu0 0
    %195 = vmatpush.bf16.msra.mxu0 0
    %196 = vmatpush.bf16.msra.mxu0 0
    %197 = vmatpush.bf16.msra.mxu0 0
    %198 = vmatpush.bf16.msra.mxu0 %v140
    %199 = vmatpush.bf16.msra.mxu0 %v132
    %200 = vmatmul.bf16.gmra.mxu0 %v164
    %v201 = vpop.f32.mrf.mxu0
    %v202 = vadd.f32 %v68, %v201
    %v203 = vpop.f32.mrf.mxu0
    %204 = vdwg.mxu0
    %205 = vmatpush.bf16.msra.mxu0 0
    %206 = vmatpush.bf16.msra.mxu0 0
    %207 = vmatpush.bf16.msra.mxu0 0
    %208 = vmatpush.bf16.msra.mxu0 0
    %209 = vmatpush.bf16.msra.mxu0 0
    %210 = vmatpush.bf16.msra.mxu0 0
    %211 = vmatpush.bf16.msra.mxu0 %v141
    %212 = vmatpush.bf16.msra.mxu0 %v133
    %213 = vmatmul.bf16.gmra.mxu0 %v164
    %v214 = vpop.f32.mrf.mxu0
    %v215 = vadd.f32 %v69, %v214
    %v216 = vpop.f32.mrf.mxu0
    %217 = vdwg.mxu0
    %218 = vmatpush.bf16.msra.mxu0 0
    %219 = vmatpush.bf16.msra.mxu0 0
    %220 = vmatpush.bf16.msra.mxu0 0
    %221 = vmatpush.bf16.msra.mxu0 0
    %222 = vmatpush.bf16.msra.mxu0 0
    %223 = vmatpush.bf16.msra.mxu0 0
    %224 = vmatpush.bf16.msra.mxu0 %v142
    %225 = vmatpush.bf16.msra.mxu0 %v134
    %226 = vmatmul.bf16.gmra.mxu0 %v164
    %v227 = vpop.f32.mrf.mxu0
    %v228 = vadd.f32 %v70, %v227
    %v229 = vpop.f32.mrf.mxu0
    %230 = vdwg.mxu0
    %231 = vmatpush.bf16.msra.mxu0 0
    %232 = vmatpush.bf16.msra.mxu0 0
    %233 = vmatpush.bf16.msra.mxu0 0
    %234 = vmatpush.bf16.msra.mxu0 0
    %235 = vmatpush.bf16.msra.mxu0 0
    %236 = vmatpush.bf16.msra.mxu0 0
    %237 = vmatpush.bf16.msra.mxu0 %v143
    %238 = vmatpush.bf16.msra.mxu0 %v135
    %239 = vmatmul.bf16.gmra.mxu0 %v164
    %v240 = vpop.f32.mrf.mxu0
    %v241 = vadd.f32 %v71, %v240
    %v242 = vpop.f32.mrf.mxu0
    %243 = vdwg.mxu0
    %244 = vmatpush.bf16.msra.mxu0 0
    %245 = vmatpush.bf16.msra.mxu0 0
    %246 = vmatpush.bf16.msra.mxu0 0
    %247 = vmatpush.bf16.msra.mxu0 0
    %248 = vmatpush.bf16.msra.mxu0 0
    %249 = vmatpush.bf16.msra.mxu0 0
    %250 = vmatpush.bf16.msra.mxu0 %v144
    %251 = vmatpush.bf16.msra.mxu0 %v136
    %252 = vmatmul.bf16.gmra.mxu0 %v164
    %v253 = vpop.f32.mrf.mxu0
    %v254 = vadd.f32 %v72, %v253
    %v255 = vpop.f32.mrf.mxu0
    %256 = vdwg.mxu0
    %257 = vmatpush.bf16.msra.mxu0 0
    %258 = vmatpush.bf16.msra.mxu0 0
    %259 = vmatpush.bf16.msra.mxu0 0
    %260 = vmatpush.bf16.msra.mxu0 0
    %261 = vmatpush.bf16.msra.mxu0 0
    %262 = vmatpush.bf16.msra.mxu0 0
    %263 = vmatpush.bf16.msra.mxu0 %v145
    %264 = vmatpush.bf16.msra.mxu0 %v137
    %265 = vmatmul.bf16.gmra.mxu0 %v164
    %v266 = vpop.f32.mrf.mxu0
    %v267 = vadd.f32 %v73, %v266
    %v268 = vpop.f32.mrf.mxu0
    %269 = vdwg.mxu0
    %v270 = vmax.f32 %v176, 0.0
    %v271 = vmax.f32 %v189, 0.0
    %v272 = vmax.f32 %v202, 0.0
    %v273 = vmax.f32 %v215, 0.0
    %v274 = vmax.f32 %v228, 0.0
    %v275 = vmax.f32 %v241, 0.0
    %v276 = vmax.f32 %v254, 0.0
    %v277 = vmax.f32 %v267, 0.0
    %v278 = vld [vmem:[#allocation2] sm:$0xff]
    %v279 = vld [vmem:[#allocation2 + $0x8] sm:$0xff]
    %v280 = vld [vmem:[#allocation2 + $0x10] sm:$0xff]
    %v281 = vld [vmem:[#allocation2 + $0x18] sm:$0xff]
    %v282 = vld [vmem:[#allocation2 + $0x20] sm:$0xff]
    %v283 = vld [vmem:[#allocation2 + $0x28] sm:$0xff]
    %v284 = vld [vmem:[#allocation2 + $0x30] sm:$0xff]
    %v285 = vld [vmem:[#allocation2 + $0x38] sm:$0xff]
    %v286 = vld [vmem:[#allocation2 + $0x40] sm:$0xff]
    %v287 = vld [vmem:[#allocation2 + $0x48] sm:$0xff]
    %v288 = vld [vmem:[#allocation2 + $0x50] sm:$0xff]
    %v289 = vld [vmem:[#allocation2 + $0x58] sm:$0xff]
    %v290 = vld [vmem:[#allocation2 + $0x60] sm:$0xff]
    %v291 = vld [vmem:[#allocation2 + $0x68] sm:$0xff]
    %v292 = vld [vmem:[#allocation2 + $0x70] sm:$0xff]
    %v293 = vld [vmem:[#allocation2 + $0x78] sm:$0xff]
    %v294 = vld [vmem:[#allocation2 + $0x80] sm:$0xff]
    %v295 = vld [vmem:[#allocation2 + $0x88] sm:$0xff]
    %v296 = vld [vmem:[#allocation2 + $0x90] sm:$0xff]
    %v297 = vld [vmem:[#allocation2 + $0x98] sm:$0xff]
    %v298 = vld [vmem:[#allocation2 + $0xa0] sm:$0xff]
    %v299 = vld [vmem:[#allocation2 + $0xa8] sm:$0xff]
    %v300 = vld [vmem:[#allocation2 + $0xb0] sm:$0xff]
    %v301 = vld [vmem:[#allocation2 + $0xb8] sm:$0xff]
    %v302 = vld [vmem:[#allocation2 + $0xc0] sm:$0xff]
    %v303 = vld [vmem:[#allocation2 + $0xc8] sm:$0xff]
    %v304 = vld [vmem:[#allocation2 + $0xd0] sm:$0xff]
    %v305 = vld [vmem:[#allocation2 + $0xd8] sm:$0xff]
    %v306 = vld [vmem:[#allocation2 + $0xe0] sm:$0xff]
    %v307 = vld [vmem:[#allocation2 + $0xe8] sm:$0xff]
    %v308 = vld [vmem:[#allocation2 + $0xf0] sm:$0xff]
    %v309 = vld [vmem:[#allocation2 + $0xf8] sm:$0xff]
    %v310 = vld [vmem:[#allocation2 + $0x100] sm:$0xff]
    %v311 = vld [vmem:[#allocation2 + $0x108] sm:$0xff]
    %v312 = vld [vmem:[#allocation2 + $0x110] sm:$0xff]
    %v313 = vld [vmem:[#allocation2 + $0x118] sm:$0xff]
    %v314 = vld [vmem:[#allocation2 + $0x120] sm:$0xff]
    %v315 = vld [vmem:[#allocation2 + $0x128] sm:$0xff]
    %v316 = vld [vmem:[#allocation2 + $0x130] sm:$0xff]
    %v317 = vld [vmem:[#allocation2 + $0x138] sm:$0xff]
    %v318 = vld [vmem:[#allocation2 + $0x140] sm:$0xff]
    %v319 = vld [vmem:[#allocation2 + $0x148] sm:$0xff]
    %v320 = vld [vmem:[#allocation2 + $0x150] sm:$0xff]
    %v321 = vld [vmem:[#allocation2 + $0x158] sm:$0xff]
    %v322 = vld [vmem:[#allocation2 + $0x160] sm:$0xff]
    %v323 = vld [vmem:[#allocation2 + $0x168] sm:$0xff]
    %v324 = vld [vmem:[#allocation2 + $0x170] sm:$0xff]
    %v325 = vld [vmem:[#allocation2 + $0x178] sm:$0xff]
    %v326 = vld [vmem:[#allocation2 + $0x180] sm:$0xff]
    %v327 = vld [vmem:[#allocation2 + $0x188] sm:$0xff]
    %v328 = vld [vmem:[#allocation2 + $0x190] sm:$0xff]
    %v329 = vld [vmem:[#allocation2 + $0x198] sm:$0xff]
    %v330 = vld [vmem:[#allocation2 + $0x1a0] sm:$0xff]
    %v331 = vld [vmem:[#allocation2 + $0x1a8] sm:$0xff]
    %v332 = vld [vmem:[#allocation2 + $0x1b0] sm:$0xff]
    %v333 = vld [vmem:[#allocation2 + $0x1b8] sm:$0xff]
    %v334 = vld [vmem:[#allocation2 + $0x1c0] sm:$0xff]
    %v335 = vld [vmem:[#allocation2 + $0x1c8] sm:$0xff]
    %v336 = vld [vmem:[#allocation2 + $0x1d0] sm:$0xff]
    %v337 = vld [vmem:[#allocation2 + $0x1d8] sm:$0xff]
    %v338 = vld [vmem:[#allocation2 + $0x1e0] sm:$0xff]
    %v339 = vld [vmem:[#allocation2 + $0x1e8] sm:$0xff]
    %v340 = vld [vmem:[#allocation2 + $0x1f0] sm:$0xff]
    %v341 = vld [vmem:[#allocation2 + $0x1f8] sm:$0xff]
    %v342 = vld [vmem:[#allocation2 + $0x200] sm:$0xff]
    %v343 = vld [vmem:[#allocation2 + $0x208] sm:$0xff]
    %v344 = vld [vmem:[#allocation2 + $0x210] sm:$0xff]
    %v345 = vld [vmem:[#allocation2 + $0x218] sm:$0xff]
    %v346 = vld [vmem:[#allocation2 + $0x220] sm:$0xff]
    %v347 = vld [vmem:[#allocation2 + $0x228] sm:$0xff]
    %v348 = vld [vmem:[#allocation2 + $0x230] sm:$0xff]
    %v349 = vld [vmem:[#allocation2 + $0x238] sm:$0xff]
    %v350 = vld [vmem:[#allocation2 + $0x240] sm:$0xff]
    %v351 = vld [vmem:[#allocation2 + $0x248] sm:$0xff]
    %v352 = vld [vmem:[#allocation2 + $0x250] sm:$0xff]
    %v353 = vld [vmem:[#allocation2 + $0x258] sm:$0xff]
    %v354 = vld [vmem:[#allocation2 + $0x260] sm:$0xff]
    %v355 = vld [vmem:[#allocation2 + $0x268] sm:$0xff]
    %v356 = vld [vmem:[#allocation2 + $0x270] sm:$0xff]
    %v357 = vld [vmem:[#allocation2 + $0x278] sm:$0xff]
    %v358 = vld [vmem:[#allocation2 + $0x280] sm:$0xff]
    %v359 = vld [vmem:[#allocation2 + $0x288] sm:$0xff]
    %v360 = vld [vmem:[#allocation2 + $0x290] sm:$0xff]
    %v361 = vld [vmem:[#allocation2 + $0x298] sm:$0xff]
    %v362 = vld [vmem:[#allocation2 + $0x2a0] sm:$0xff]
    %v363 = vld [vmem:[#allocation2 + $0x2a8] sm:$0xff]
    %v364 = vld [vmem:[#allocation2 + $0x2b0] sm:$0xff]
    %v365 = vld [vmem:[#allocation2 + $0x2b8] sm:$0xff]
    %v366 = vld [vmem:[#allocation2 + $0x2c0] sm:$0xff]
    %v367 = vld [vmem:[#allocation2 + $0x2c8] sm:$0xff]
    %v368 = vld [vmem:[#allocation2 + $0x2d0] sm:$0xff]
    %v369 = vld [vmem:[#allocation2 + $0x2d8] sm:$0xff]
    %v370 = vld [vmem:[#allocation2 + $0x2e0] sm:$0xff]
    %v371 = vld [vmem:[#allocation2 + $0x2e8] sm:$0xff]
    %v372 = vld [vmem:[#allocation2 + $0x2f0] sm:$0xff]
    %v373 = vld [vmem:[#allocation2 + $0x2f8] sm:$0xff]
    %v374 = vld [vmem:[#allocation2 + $0x300] sm:$0xff]
    %v375 = vld [vmem:[#allocation2 + $0x308] sm:$0xff]
    %v376 = vld [vmem:[#allocation2 + $0x310] sm:$0xff]
    %v377 = vld [vmem:[#allocation2 + $0x318] sm:$0xff]
    %v378 = vld [vmem:[#allocation2 + $0x320] sm:$0xff]
    %v379 = vld [vmem:[#allocation2 + $0x328] sm:$0xff]
    %v380 = vld [vmem:[#allocation2 + $0x330] sm:$0xff]
    %v381 = vld [vmem:[#allocation2 + $0x338] sm:$0xff]
    %v382 = vld [vmem:[#allocation2 + $0x340] sm:$0xff]
    %v383 = vld [vmem:[#allocation2 + $0x348] sm:$0xff]
    %v384 = vld [vmem:[#allocation2 + $0x350] sm:$0xff]
    %v385 = vld [vmem:[#allocation2 + $0x358] sm:$0xff]
    %v386 = vld [vmem:[#allocation2 + $0x360] sm:$0xff]
    %v387 = vld [vmem:[#allocation2 + $0x368] sm:$0xff]
    %v388 = vld [vmem:[#allocation2 + $0x370] sm:$0xff]
    %v389 = vld [vmem:[#allocation2 + $0x378] sm:$0xff]
    %v390 = vld [vmem:[#allocation2 + $0x380] sm:$0xff]
    %v391 = vld [vmem:[#allocation2 + $0x388] sm:$0xff]
    %v392 = vld [vmem:[#allocation2 + $0x390] sm:$0xff]
    %v393 = vld [vmem:[#allocation2 + $0x398] sm:$0xff]
    %v394 = vld [vmem:[#allocation2 + $0x3a0] sm:$0xff]
    %v395 = vld [vmem:[#allocation2 + $0x3a8] sm:$0xff]
    %v396 = vld [vmem:[#allocation2 + $0x3b0] sm:$0xff]
    %v397 = vld [vmem:[#allocation2 + $0x3b8] sm:$0xff]
    %v398 = vld [vmem:[#allocation2 + $0x3c0] sm:$0xff]
    %v399 = vld [vmem:[#allocation2 + $0x3c8] sm:$0xff]
    %v400 = vld [vmem:[#allocation2 + $0x3d0] sm:$0xff]
    %v401 = vld [vmem:[#allocation2 + $0x3d8] sm:$0xff]
    %v402 = vld [vmem:[#allocation2 + $0x3e0] sm:$0xff]
    %v403 = vld [vmem:[#allocation2 + $0x3e8] sm:$0xff]
    %v404 = vld [vmem:[#allocation2 + $0x3f0] sm:$0xff]
    %v405 = vld [vmem:[#allocation2 + $0x3f8] sm:$0xff]
    %v406 = vld [vmem:[#allocation2 + $0x400] sm:$0xff]
    %v407 = vld [vmem:[#allocation2 + $0x408] sm:$0xff]
    %v408 = vld [vmem:[#allocation2 + $0x410] sm:$0xff]
    %v409 = vld [vmem:[#allocation2 + $0x418] sm:$0xff]
    %v410 = vld [vmem:[#allocation2 + $0x420] sm:$0xff]
    %v411 = vld [vmem:[#allocation2 + $0x428] sm:$0xff]
    %v412 = vld [vmem:[#allocation2 + $0x430] sm:$0xff]
    %v413 = vld [vmem:[#allocation2 + $0x438] sm:$0xff]
    %v414 = vld [vmem:[#allocation2 + $0x440] sm:$0xff]
    %v415 = vld [vmem:[#allocation2 + $0x448] sm:$0xff]
    %v416 = vld [vmem:[#allocation2 + $0x450] sm:$0xff]
    %v417 = vld [vmem:[#allocation2 + $0x458] sm:$0xff]
    %v418 = vld [vmem:[#allocation2 + $0x460] sm:$0xff]
    %v419 = vld [vmem:[#allocation2 + $0x468] sm:$0xff]
    %v420 = vld [vmem:[#allocation2 + $0x470] sm:$0xff]
    %v421 = vld [vmem:[#allocation2 + $0x478] sm:$0xff]
    %v422 = vld [vmem:[#allocation2 + $0x480] sm:$0xff]
    %v423 = vld [vmem:[#allocation2 + $0x488] sm:$0xff]
    %v424 = vld [vmem:[#allocation2 + $0x490] sm:$0xff]
    %v425 = vld [vmem:[#allocation2 + $0x498] sm:$0xff]
    %v426 = vld [vmem:[#allocation2 + $0x4a0] sm:$0xff]
    %v427 = vld [vmem:[#allocation2 + $0x4a8] sm:$0xff]
    %v428 = vld [vmem:[#allocation2 + $0x4b0] sm:$0xff]
    %v429 = vld [vmem:[#allocation2 + $0x4b8] sm:$0xff]
    %v430 = vld [vmem:[#allocation2 + $0x4c0] sm:$0xff]
    %v431 = vld [vmem:[#allocation2 + $0x4c8] sm:$0xff]
    %v432 = vld [vmem:[#allocation2 + $0x4d0] sm:$0xff]
    %v433 = vld [vmem:[#allocation2 + $0x4d8] sm:$0xff]
    %v434 = vld [vmem:[#allocation2 + $0x4e0] sm:$0xff]
    %v435 = vld [vmem:[#allocation2 + $0x4e8] sm:$0xff]
    %v436 = vld [vmem:[#allocation2 + $0x4f0] sm:$0xff]
    %v437 = vld [vmem:[#allocation2 + $0x4f8] sm:$0xff]
    %v438 = vunpack.c.0.s8 %v278
    %v439 = vunpack.c.0.s8 %v279
    %v440 = vunpack.c.0.s8 %v280
    %v441 = vunpack.c.0.s8 %v281
    %v442 = vunpack.c.0.s8 %v282
    %v443 = vunpack.c.1.s8 %v278
    %v444 = vunpack.c.1.s8 %v279
    %v445 = vunpack.c.1.s8 %v280
    %v446 = vunpack.c.1.s8 %v281
    %v447 = vunpack.c.1.s8 %v282
    %v448 = vunpack.c.2.s8 %v278
    %v449 = vunpack.c.2.s8 %v279
    %v450 = vunpack.c.2.s8 %v280
    %v451 = vunpack.c.2.s8 %v281
    %v452 = vunpack.c.2.s8 %v282
    %v453 = vunpack.c.3.s8 %v278
    %v454 = vunpack.c.3.s8 %v279
    %v455 = vunpack.c.3.s8 %v280
    %v456 = vunpack.c.3.s8 %v281
    %v457 = vunpack.c.3.s8 %v282
    %v458 = vunpack.c.0.s8 %v283
    %v459 = vunpack.c.0.s8 %v284
    %v460 = vunpack.c.0.s8 %v285
    %v461 = vunpack.c.0.s8 %v286
    %v462 = vunpack.c.0.s8 %v287
    %v463 = vunpack.c.1.s8 %v283
    %v464 = vunpack.c.1.s8 %v284
    %v465 = vunpack.c.1.s8 %v285
    %v466 = vunpack.c.1.s8 %v286
    %v467 = vunpack.c.1.s8 %v287
    %v468 = vunpack.c.2.s8 %v283
    %v469 = vunpack.c.2.s8 %v284
    %v470 = vunpack.c.2.s8 %v285
    %v471 = vunpack.c.2.s8 %v286
    %v472 = vunpack.c.2.s8 %v287
    %v473 = vunpack.c.3.s8 %v283
    %v474 = vunpack.c.3.s8 %v284
    %v475 = vunpack.c.3.s8 %v285
    %v476 = vunpack.c.3.s8 %v286
    %v477 = vunpack.c.3.s8 %v287
    %v478 = vunpack.c.0.s8 %v288
    %v479 = vunpack.c.0.s8 %v289
    %v480 = vunpack.c.0.s8 %v290
    %v481 = vunpack.c.0.s8 %v291
    %v482 = vunpack.c.0.s8 %v292
    %v483 = vunpack.c.1.s8 %v288
    %v484 = vunpack.c.1.s8 %v289
    %v485 = vunpack.c.1.s8 %v290
    %v486 = vunpack.c.1.s8 %v291
    %v487 = vunpack.c.1.s8 %v292
    %v488 = vunpack.c.2.s8 %v288
    %v489 = vunpack.c.2.s8 %v289
    %v490 = vunpack.c.2.s8 %v290
    %v491 = vunpack.c.2.s8 %v291
    %v492 = vunpack.c.2.s8 %v292
    %v493 = vunpack.c.3.s8 %v288
    %v494 = vunpack.c.3.s8 %v289
    %v495 = vunpack.c.3.s8 %v290
    %v496 = vunpack.c.3.s8 %v291
    %v497 = vunpack.c.3.s8 %v292
    %v498 = vunpack.c.0.s8 %v293
    %v499 = vunpack.c.0.s8 %v294
    %v500 = vunpack.c.0.s8 %v295
    %v501 = vunpack.c.0.s8 %v296
    %v502 = vunpack.c.0.s8 %v297
    %v503 = vunpack.c.1.s8 %v293
    %v504 = vunpack.c.1.s8 %v294
    %v505 = vunpack.c.1.s8 %v295
    %v506 = vunpack.c.1.s8 %v296
    %v507 = vunpack.c.1.s8 %v297
    %v508 = vunpack.c.2.s8 %v293
    %v509 = vunpack.c.2.s8 %v294
    %v510 = vunpack.c.2.s8 %v295
    %v511 = vunpack.c.2.s8 %v296
    %v512 = vunpack.c.2.s8 %v297
    %v513 = vunpack.c.3.s8 %v293
    %v514 = vunpack.c.3.s8 %v294
    %v515 = vunpack.c.3.s8 %v295
    %v516 = vunpack.c.3.s8 %v296
    %v517 = vunpack.c.3.s8 %v297
    %v518 = vunpack.c.0.s8 %v298
    %v519 = vunpack.c.0.s8 %v299
    %v520 = vunpack.c.0.s8 %v300
    %v521 = vunpack.c.0.s8 %v301
    %v522 = vunpack.c.0.s8 %v302
    %v523 = vunpack.c.1.s8 %v298
    %v524 = vunpack.c.1.s8 %v299
    %v525 = vunpack.c.1.s8 %v300
    %v526 = vunpack.c.1.s8 %v301
    %v527 = vunpack.c.1.s8 %v302
    %v528 = vunpack.c.2.s8 %v298
    %v529 = vunpack.c.2.s8 %v299
    %v530 = vunpack.c.2.s8 %v300
    %v531 = vunpack.c.2.s8 %v301
    %v532 = vunpack.c.2.s8 %v302
    %v533 = vunpack.c.3.s8 %v298
    %v534 = vunpack.c.3.s8 %v299
    %v535 = vunpack.c.3.s8 %v300
    %v536 = vunpack.c.3.s8 %v301
    %v537 = vunpack.c.3.s8 %v302
    %v538 = vunpack.c.0.s8 %v303
    %v539 = vunpack.c.0.s8 %v304
    %v540 = vunpack.c.0.s8 %v305
    %v541 = vunpack.c.0.s8 %v306
    %v542 = vunpack.c.0.s8 %v307
    %v543 = vunpack.c.1.s8 %v303
    %v544 = vunpack.c.1.s8 %v304
    %v545 = vunpack.c.1.s8 %v305
    %v546 = vunpack.c.1.s8 %v306
    %v547 = vunpack.c.1.s8 %v307
    %v548 = vunpack.c.2.s8 %v303
    %v549 = vunpack.c.2.s8 %v304
    %v550 = vunpack.c.2.s8 %v305
    %v551 = vunpack.c.2.s8 %v306
    %v552 = vunpack.c.2.s8 %v307
    %v553 = vunpack.c.3.s8 %v303
    %v554 = vunpack.c.3.s8 %v304
    %v555 = vunpack.c.3.s8 %v305
    %v556 = vunpack.c.3.s8 %v306
    %v557 = vunpack.c.3.s8 %v307
    %v558 = vunpack.c.0.s8 %v308
    %v559 = vunpack.c.0.s8 %v309
    %v560 = vunpack.c.0.s8 %v310
    %v561 = vunpack.c.0.s8 %v311
    %v562 = vunpack.c.0.s8 %v312
    %v563 = vunpack.c.1.s8 %v308
    %v564 = vunpack.c.1.s8 %v309
    %v565 = vunpack.c.1.s8 %v310
    %v566 = vunpack.c.1.s8 %v311
    %v567 = vunpack.c.1.s8 %v312
    %v568 = vunpack.c.2.s8 %v308
    %v569 = vunpack.c.2.s8 %v309
    %v570 = vunpack.c.2.s8 %v310
    %v571 = vunpack.c.2.s8 %v311
    %v572 = vunpack.c.2.s8 %v312
    %v573 = vunpack.c.3.s8 %v308
    %v574 = vunpack.c.3.s8 %v309
    %v575 = vunpack.c.3.s8 %v310
    %v576 = vunpack.c.3.s8 %v311
    %v577 = vunpack.c.3.s8 %v312
    %v578 = vunpack.c.0.s8 %v313
    %v579 = vunpack.c.0.s8 %v314
    %v580 = vunpack.c.0.s8 %v315
    %v581 = vunpack.c.0.s8 %v316
    %v582 = vunpack.c.0.s8 %v317
    %v583 = vunpack.c.1.s8 %v313
    %v584 = vunpack.c.1.s8 %v314
    %v585 = vunpack.c.1.s8 %v315
    %v586 = vunpack.c.1.s8 %v316
    %v587 = vunpack.c.1.s8 %v317
    %v588 = vunpack.c.2.s8 %v313
    %v589 = vunpack.c.2.s8 %v314
    %v590 = vunpack.c.2.s8 %v315
    %v591 = vunpack.c.2.s8 %v316
    %v592 = vunpack.c.2.s8 %v317
    %v593 = vunpack.c.3.s8 %v313
    %v594 = vunpack.c.3.s8 %v314
    %v595 = vunpack.c.3.s8 %v315
    %v596 = vunpack.c.3.s8 %v316
    %v597 = vunpack.c.3.s8 %v317
    %v598 = vunpack.c.0.s8 %v318
    %v599 = vunpack.c.0.s8 %v319
    %v600 = vunpack.c.0.s8 %v320
    %v601 = vunpack.c.0.s8 %v321
    %v602 = vunpack.c.0.s8 %v322
    %v603 = vunpack.c.1.s8 %v318
    %v604 = vunpack.c.1.s8 %v319
    %v605 = vunpack.c.1.s8 %v320
    %v606 = vunpack.c.1.s8 %v321
    %v607 = vunpack.c.1.s8 %v322
    %v608 = vunpack.c.2.s8 %v318
    %v609 = vunpack.c.2.s8 %v319
    %v610 = vunpack.c.2.s8 %v320
    %v611 = vunpack.c.2.s8 %v321
    %v612 = vunpack.c.2.s8 %v322
    %v613 = vunpack.c.3.s8 %v318
    %v614 = vunpack.c.3.s8 %v319
    %v615 = vunpack.c.3.s8 %v320
    %v616 = vunpack.c.3.s8 %v321
    %v617 = vunpack.c.3.s8 %v322
    %v618 = vunpack.c.0.s8 %v323
    %v619 = vunpack.c.0.s8 %v324
    %v620 = vunpack.c.0.s8 %v325
    %v621 = vunpack.c.0.s8 %v326
    %v622 = vunpack.c.0.s8 %v327
    %v623 = vunpack.c.1.s8 %v323
    %v624 = vunpack.c.1.s8 %v324
    %v625 = vunpack.c.1.s8 %v325
    %v626 = vunpack.c.1.s8 %v326
    %v627 = vunpack.c.1.s8 %v327
    %v628 = vunpack.c.2.s8 %v323
    %v629 = vunpack.c.2.s8 %v324
    %v630 = vunpack.c.2.s8 %v325
    %v631 = vunpack.c.2.s8 %v326
    %v632 = vunpack.c.2.s8 %v327
    %v633 = vunpack.c.3.s8 %v323
    %v634 = vunpack.c.3.s8 %v324
    %v635 = vunpack.c.3.s8 %v325
    %v636 = vunpack.c.3.s8 %v326
    %v637 = vunpack.c.3.s8 %v327
    %v638 = vunpack.c.0.s8 %v328
    %v639 = vunpack.c.0.s8 %v329
    %v640 = vunpack.c.0.s8 %v330
    %v641 = vunpack.c.0.s8 %v331
    %v642 = vunpack.c.0.s8 %v332
    %v643 = vunpack.c.1.s8 %v328
    %v644 = vunpack.c.1.s8 %v329
    %v645 = vunpack.c.1.s8 %v330
    %v646 = vunpack.c.1.s8 %v331
    %v647 = vunpack.c.1.s8 %v332
    %v648 = vunpack.c.2.s8 %v328
    %v649 = vunpack.c.2.s8 %v329
    %v650 = vunpack.c.2.s8 %v330
    %v651 = vunpack.c.2.s8 %v331
    %v652 = vunpack.c.2.s8 %v332
    %v653 = vunpack.c.3.s8 %v328
    %v654 = vunpack.c.3.s8 %v329
    %v655 = vunpack.c.3.s8 %v330
    %v656 = vunpack.c.3.s8 %v331
    %v657 = vunpack.c.3.s8 %v332
    %v658 = vunpack.c.0.s8 %v333
    %v659 = vunpack.c.0.s8 %v334
    %v660 = vunpack.c.0.s8 %v335
    %v661 = vunpack.c.0.s8 %v336
    %v662 = vunpack.c.0.s8 %v337
    %v663 = vunpack.c.1.s8 %v333
    %v664 = vunpack.c.1.s8 %v334
    %v665 = vunpack.c.1.s8 %v335
    %v666 = vunpack.c.1.s8 %v336
    %v667 = vunpack.c.1.s8 %v337
    %v668 = vunpack.c.2.s8 %v333
    %v669 = vunpack.c.2.s8 %v334
    %v670 = vunpack.c.2.s8 %v335
    %v671 = vunpack.c.2.s8 %v336
    %v672 = vunpack.c.2.s8 %v337
    %v673 = vunpack.c.3.s8 %v333
    %v674 = vunpack.c.3.s8 %v334
    %v675 = vunpack.c.3.s8 %v335
    %v676 = vunpack.c.3.s8 %v336
    %v677 = vunpack.c.3.s8 %v337
    %v678 = vunpack.c.0.s8 %v338
    %v679 = vunpack.c.0.s8 %v339
    %v680 = vunpack.c.0.s8 %v340
    %v681 = vunpack.c.0.s8 %v341
    %v682 = vunpack.c.0.s8 %v342
    %v683 = vunpack.c.1.s8 %v338
    %v684 = vunpack.c.1.s8 %v339
    %v685 = vunpack.c.1.s8 %v340
    %v686 = vunpack.c.1.s8 %v341
    %v687 = vunpack.c.1.s8 %v342
    %v688 = vunpack.c.2.s8 %v338
    %v689 = vunpack.c.2.s8 %v339
    %v690 = vunpack.c.2.s8 %v340
    %v691 = vunpack.c.2.s8 %v341
    %v692 = vunpack.c.2.s8 %v342
    %v693 = vunpack.c.3.s8 %v338
    %v694 = vunpack.c.3.s8 %v339
    %v695 = vunpack.c.3.s8 %v340
    %v696 = vunpack.c.3.s8 %v341
    %v697 = vunpack.c.3.s8 %v342
    %v698 = vunpack.c.0.s8 %v343
    %v699 = vunpack.c.0.s8 %v344
    %v700 = vunpack.c.0.s8 %v345
    %v701 = vunpack.c.0.s8 %v346
    %v702 = vunpack.c.0.s8 %v347
    %v703 = vunpack.c.1.s8 %v343
    %v704 = vunpack.c.1.s8 %v344
    %v705 = vunpack.c.1.s8 %v345
    %v706 = vunpack.c.1.s8 %v346
    %v707 = vunpack.c.1.s8 %v347
    %v708 = vunpack.c.2.s8 %v343
    %v709 = vunpack.c.2.s8 %v344
    %v710 = vunpack.c.2.s8 %v345
    %v711 = vunpack.c.2.s8 %v346
    %v712 = vunpack.c.2.s8 %v347
    %v713 = vunpack.c.3.s8 %v343
    %v714 = vunpack.c.3.s8 %v344
    %v715 = vunpack.c.3.s8 %v345
    %v716 = vunpack.c.3.s8 %v346
    %v717 = vunpack.c.3.s8 %v347
    %v718 = vunpack.c.0.s8 %v348
    %v719 = vunpack.c.0.s8 %v349
    %v720 = vunpack.c.0.s8 %v350
    %v721 = vunpack.c.0.s8 %v351
    %v722 = vunpack.c.0.s8 %v352
    %v723 = vunpack.c.1.s8 %v348
    %v724 = vunpack.c.1.s8 %v349
    %v725 = vunpack.c.1.s8 %v350
    %v726 = vunpack.c.1.s8 %v351
    %v727 = vunpack.c.1.s8 %v352
    %v728 = vunpack.c.2.s8 %v348
    %v729 = vunpack.c.2.s8 %v349
    %v730 = vunpack.c.2.s8 %v350
    %v731 = vunpack.c.2.s8 %v351
    %v732 = vunpack.c.2.s8 %v352
    %v733 = vunpack.c.3.s8 %v348
    %v734 = vunpack.c.3.s8 %v349
    %v735 = vunpack.c.3.s8 %v350
    %v736 = vunpack.c.3.s8 %v351
    %v737 = vunpack.c.3.s8 %v352
    %v738 = vunpack.c.0.s8 %v353
    %v739 = vunpack.c.0.s8 %v354
    %v740 = vunpack.c.0.s8 %v355
    %v741 = vunpack.c.0.s8 %v356
    %v742 = vunpack.c.0.s8 %v357
    %v743 = vunpack.c.1.s8 %v353
    %v744 = vunpack.c.1.s8 %v354
    %v745 = vunpack.c.1.s8 %v355
    %v746 = vunpack.c.1.s8 %v356
    %v747 = vunpack.c.1.s8 %v357
    %v748 = vunpack.c.2.s8 %v353
    %v749 = vunpack.c.2.s8 %v354
    %v750 = vunpack.c.2.s8 %v355
    %v751 = vunpack.c.2.s8 %v356
    %v752 = vunpack.c.2.s8 %v357
    %v753 = vunpack.c.3.s8 %v353
    %v754 = vunpack.c.3.s8 %v354
    %v755 = vunpack.c.3.s8 %v355
    %v756 = vunpack.c.3.s8 %v356
    %v757 = vunpack.c.3.s8 %v357
    %v758 = vunpack.c.0.s8 %v358
    %v759 = vunpack.c.0.s8 %v359
    %v760 = vunpack.c.0.s8 %v360
    %v761 = vunpack.c.0.s8 %v361
    %v762 = vunpack.c.0.s8 %v362
    %v763 = vunpack.c.1.s8 %v358
    %v764 = vunpack.c.1.s8 %v359
    %v765 = vunpack.c.1.s8 %v360
    %v766 = vunpack.c.1.s8 %v361
    %v767 = vunpack.c.1.s8 %v362
    %v768 = vunpack.c.2.s8 %v358
    %v769 = vunpack.c.2.s8 %v359
    %v770 = vunpack.c.2.s8 %v360
    %v771 = vunpack.c.2.s8 %v361
    %v772 = vunpack.c.2.s8 %v362
    %v773 = vunpack.c.3.s8 %v358
    %v774 = vunpack.c.3.s8 %v359
    %v775 = vunpack.c.3.s8 %v360
    %v776 = vunpack.c.3.s8 %v361
    %v777 = vunpack.c.3.s8 %v362
    %v778 = vunpack.c.0.s8 %v363
    %v779 = vunpack.c.0.s8 %v364
    %v780 = vunpack.c.0.s8 %v365
    %v781 = vunpack.c.0.s8 %v366
    %v782 = vunpack.c.0.s8 %v367
    %v783 = vunpack.c.1.s8 %v363
    %v784 = vunpack.c.1.s8 %v364
    %v785 = vunpack.c.1.s8 %v365
    %v786 = vunpack.c.1.s8 %v366
    %v787 = vunpack.c.1.s8 %v367
    %v788 = vunpack.c.2.s8 %v363
    %v789 = vunpack.c.2.s8 %v364
    %v790 = vunpack.c.2.s8 %v365
    %v791 = vunpack.c.2.s8 %v366
    %v792 = vunpack.c.2.s8 %v367
    %v793 = vunpack.c.3.s8 %v363
    %v794 = vunpack.c.3.s8 %v364
    %v795 = vunpack.c.3.s8 %v365
    %v796 = vunpack.c.3.s8 %v366
    %v797 = vunpack.c.3.s8 %v367
    %v798 = vunpack.c.0.s8 %v368
    %v799 = vunpack.c.0.s8 %v369
    %v800 = vunpack.c.0.s8 %v370
    %v801 = vunpack.c.0.s8 %v371
    %v802 = vunpack.c.0.s8 %v372
    %v803 = vunpack.c.1.s8 %v368
    %v804 = vunpack.c.1.s8 %v369
    %v805 = vunpack.c.1.s8 %v370
    %v806 = vunpack.c.1.s8 %v371
    %v807 = vunpack.c.1.s8 %v372
    %v808 = vunpack.c.2.s8 %v368
    %v809 = vunpack.c.2.s8 %v369
    %v810 = vunpack.c.2.s8 %v370
    %v811 = vunpack.c.2.s8 %v371
    %v812 = vunpack.c.2.s8 %v372
    %v813 = vunpack.c.3.s8 %v368
    %v814 = vunpack.c.3.s8 %v369
    %v815 = vunpack.c.3.s8 %v370
    %v816 = vunpack.c.3.s8 %v371
    %v817 = vunpack.c.3.s8 %v372
    %v818 = vunpack.c.0.s8 %v373
    %v819 = vunpack.c.0.s8 %v374
    %v820 = vunpack.c.0.s8 %v375
    %v821 = vunpack.c.0.s8 %v376
    %v822 = vunpack.c.0.s8 %v377
    %v823 = vunpack.c.1.s8 %v373
    %v824 = vunpack.c.1.s8 %v374
    %v825 = vunpack.c.1.s8 %v375
    %v826 = vunpack.c.1.s8 %v376
    %v827 = vunpack.c.1.s8 %v377
    %v828 = vunpack.c.2.s8 %v373
    %v829 = vunpack.c.2.s8 %v374
    %v830 = vunpack.c.2.s8 %v375
    %v831 = vunpack.c.2.s8 %v376
    %v832 = vunpack.c.2.s8 %v377
    %v833 = vunpack.c.3.s8 %v373
    %v834 = vunpack.c.3.s8 %v374
    %v835 = vunpack.c.3.s8 %v375
    %v836 = vunpack.c.3.s8 %v376
    %v837 = vunpack.c.3.s8 %v377
    %v838 = vunpack.c.0.s8 %v378
    %v839 = vunpack.c.0.s8 %v379
    %v840 = vunpack.c.0.s8 %v380
    %v841 = vunpack.c.0.s8 %v381
    %v842 = vunpack.c.0.s8 %v382
    %v843 = vunpack.c.1.s8 %v378
    %v844 = vunpack.c.1.s8 %v379
    %v845 = vunpack.c.1.s8 %v380
    %v846 = vunpack.c.1.s8 %v381
    %v847 = vunpack.c.1.s8 %v382
    %v848 = vunpack.c.2.s8 %v378
    %v849 = vunpack.c.2.s8 %v379
    %v850 = vunpack.c.2.s8 %v380
    %v851 = vunpack.c.2.s8 %v381
    %v852 = vunpack.c.2.s8 %v382
    %v853 = vunpack.c.3.s8 %v378
    %v854 = vunpack.c.3.s8 %v379
    %v855 = vunpack.c.3.s8 %v380
    %v856 = vunpack.c.3.s8 %v381
    %v857 = vunpack.c.3.s8 %v382
    %v858 = vunpack.c.0.s8 %v383
    %v859 = vunpack.c.0.s8 %v384
    %v860 = vunpack.c.0.s8 %v385
    %v861 = vunpack.c.0.s8 %v386
    %v862 = vunpack.c.0.s8 %v387
    %v863 = vunpack.c.1.s8 %v383
    %v864 = vunpack.c.1.s8 %v384
    %v865 = vunpack.c.1.s8 %v385
    %v866 = vunpack.c.1.s8 %v386
    %v867 = vunpack.c.1.s8 %v387
    %v868 = vunpack.c.2.s8 %v383
    %v869 = vunpack.c.2.s8 %v384
    %v870 = vunpack.c.2.s8 %v385
    %v871 = vunpack.c.2.s8 %v386
    %v872 = vunpack.c.2.s8 %v387
    %v873 = vunpack.c.3.s8 %v383
    %v874 = vunpack.c.3.s8 %v384
    %v875 = vunpack.c.3.s8 %v385
    %v876 = vunpack.c.3.s8 %v386
    %v877 = vunpack.c.3.s8 %v387
    %v878 = vunpack.c.0.s8 %v388
    %v879 = vunpack.c.0.s8 %v389
    %v880 = vunpack.c.0.s8 %v390
    %v881 = vunpack.c.0.s8 %v391
    %v882 = vunpack.c.0.s8 %v392
    %v883 = vunpack.c.1.s8 %v388
    %v884 = vunpack.c.1.s8 %v389
    %v885 = vunpack.c.1.s8 %v390
    %v886 = vunpack.c.1.s8 %v391
    %v887 = vunpack.c.1.s8 %v392
    %v888 = vunpack.c.2.s8 %v388
    %v889 = vunpack.c.2.s8 %v389
    %v890 = vunpack.c.2.s8 %v390
    %v891 = vunpack.c.2.s8 %v391
    %v892 = vunpack.c.2.s8 %v392
    %v893 = vunpack.c.3.s8 %v388
    %v894 = vunpack.c.3.s8 %v389
    %v895 = vunpack.c.3.s8 %v390
    %v896 = vunpack.c.3.s8 %v391
    %v897 = vunpack.c.3.s8 %v392
    %v898 = vunpack.c.0.s8 %v393
    %v899 = vunpack.c.0.s8 %v394
    %v900 = vunpack.c.0.s8 %v395
    %v901 = vunpack.c.0.s8 %v396
    %v902 = vunpack.c.0.s8 %v397
    %v903 = vunpack.c.1.s8 %v393
    %v904 = vunpack.c.1.s8 %v394
    %v905 = vunpack.c.1.s8 %v395
    %v906 = vunpack.c.1.s8 %v396
    %v907 = vunpack.c.1.s8 %v397
    %v908 = vunpack.c.2.s8 %v393
    %v909 = vunpack.c.2.s8 %v394
    %v910 = vunpack.c.2.s8 %v395
    %v911 = vunpack.c.2.s8 %v396
    %v912 = vunpack.c.2.s8 %v397
    %v913 = vunpack.c.3.s8 %v393
    %v914 = vunpack.c.3.s8 %v394
    %v915 = vunpack.c.3.s8 %v395
    %v916 = vunpack.c.3.s8 %v396
    %v917 = vunpack.c.3.s8 %v397
    %v918 = vunpack.c.0.s8 %v398
    %v919 = vunpack.c.0.s8 %v399
    %v920 = vunpack.c.0.s8 %v400
    %v921 = vunpack.c.0.s8 %v401
    %v922 = vunpack.c.0.s8 %v402
    %v923 = vunpack.c.1.s8 %v398
    %v924 = vunpack.c.1.s8 %v399
    %v925 = vunpack.c.1.s8 %v400
    %v926 = vunpack.c.1.s8 %v401
    %v927 = vunpack.c.1.s8 %v402
    %v928 = vunpack.c.2.s8 %v398
    %v929 = vunpack.c.2.s8 %v399
    %v930 = vunpack.c.2.s8 %v400
    %v931 = vunpack.c.2.s8 %v401
    %v932 = vunpack.c.2.s8 %v402
    %v933 = vunpack.c.3.s8 %v398
    %v934 = vunpack.c.3.s8 %v399
    %v935 = vunpack.c.3.s8 %v400
    %v936 = vunpack.c.3.s8 %v401
    %v937 = vunpack.c.3.s8 %v402
    %v938 = vunpack.c.0.s8 %v403
    %v939 = vunpack.c.0.s8 %v404
    %v940 = vunpack.c.0.s8 %v405
    %v941 = vunpack.c.0.s8 %v406
    %v942 = vunpack.c.0.s8 %v407
    %v943 = vunpack.c.1.s8 %v403
    %v944 = vunpack.c.1.s8 %v404
    %v945 = vunpack.c.1.s8 %v405
    %v946 = vunpack.c.1.s8 %v406
    %v947 = vunpack.c.1.s8 %v407
    %v948 = vunpack.c.2.s8 %v403
    %v949 = vunpack.c.2.s8 %v404
    %v950 = vunpack.c.2.s8 %v405
    %v951 = vunpack.c.2.s8 %v406
    %v952 = vunpack.c.2.s8 %v407
    %v953 = vunpack.c.3.s8 %v403
    %v954 = vunpack.c.3.s8 %v404
    %v955 = vunpack.c.3.s8 %v405
    %v956 = vunpack.c.3.s8 %v406
    %v957 = vunpack.c.3.s8 %v407
    %v958 = vunpack.c.0.s8 %v408
    %v959 = vunpack.c.0.s8 %v409
    %v960 = vunpack.c.0.s8 %v410
    %v961 = vunpack.c.0.s8 %v411
    %v962 = vunpack.c.0.s8 %v412
    %v963 = vunpack.c.1.s8 %v408
    %v964 = vunpack.c.1.s8 %v409
    %v965 = vunpack.c.1.s8 %v410
    %v966 = vunpack.c.1.s8 %v411
    %v967 = vunpack.c.1.s8 %v412
    %v968 = vunpack.c.2.s8 %v408
    %v969 = vunpack.c.2.s8 %v409
    %v970 = vunpack.c.2.s8 %v410
    %v971 = vunpack.c.2.s8 %v411
    %v972 = vunpack.c.2.s8 %v412
    %v973 = vunpack.c.3.s8 %v408
    %v974 = vunpack.c.3.s8 %v409
    %v975 = vunpack.c.3.s8 %v410
    %v976 = vunpack.c.3.s8 %v411
    %v977 = vunpack.c.3.s8 %v412
    %v978 = vunpack.c.0.s8 %v413
    %v979 = vunpack.c.0.s8 %v414
    %v980 = vunpack.c.0.s8 %v415
    %v981 = vunpack.c.0.s8 %v416
    %v982 = vunpack.c.0.s8 %v417
    %v983 = vunpack.c.1.s8 %v413
    %v984 = vunpack.c.1.s8 %v414
    %v985 = vunpack.c.1.s8 %v415
    %v986 = vunpack.c.1.s8 %v416
    %v987 = vunpack.c.1.s8 %v417
    %v988 = vunpack.c.2.s8 %v413
    %v989 = vunpack.c.2.s8 %v414
    %v990 = vunpack.c.2.s8 %v415
    %v991 = vunpack.c.2.s8 %v416
    %v992 = vunpack.c.2.s8 %v417
    %v993 = vunpack.c.3.s8 %v413
    %v994 = vunpack.c.3.s8 %v414
    %v995 = vunpack.c.3.s8 %v415
    %v996 = vunpack.c.3.s8 %v416
    %v997 = vunpack.c.3.s8 %v417
    %v998 = vunpack.c.0.s8 %v418
    %v999 = vunpack.c.0.s8 %v419
    %v1000 = vunpack.c.0.s8 %v420
    %v1001 = vunpack.c.0.s8 %v421
    %v1002 = vunpack.c.0.s8 %v422
    %v1003 = vunpack.c.1.s8 %v418
    %v1004 = vunpack.c.1.s8 %v419
    %v1005 = vunpack.c.1.s8 %v420
    %v1006 = vunpack.c.1.s8 %v421
    %v1007 = vunpack.c.1.s8 %v422
    %v1008 = vunpack.c.2.s8 %v418
    %v1009 = vunpack.c.2.s8 %v419
    %v1010 = vunpack.c.2.s8 %v420
    %v1011 = vunpack.c.2.s8 %v421
    %v1012 = vunpack.c.2.s8 %v422
    %v1013 = vunpack.c.3.s8 %v418
    %v1014 = vunpack.c.3.s8 %v419
    %v1015 = vunpack.c.3.s8 %v420
    %v1016 = vunpack.c.3.s8 %v421
    %v1017 = vunpack.c.3.s8 %v422
    %v1018 = vunpack.c.0.s8 %v423
    %v1019 = vunpack.c.0.s8 %v424
    %v1020 = vunpack.c.0.s8 %v425
    %v1021 = vunpack.c.0.s8 %v426
    %v1022 = vunpack.c.0.s8 %v427
    %v1023 = vunpack.c.1.s8 %v423
    %v1024 = vunpack.c.1.s8 %v424
    %v1025 = vunpack.c.1.s8 %v425
    %v1026 = vunpack.c.1.s8 %v426
    %v1027 = vunpack.c.1.s8 %v427
    %v1028 = vunpack.c.2.s8 %v423
    %v1029 = vunpack.c.2.s8 %v424
    %v1030 = vunpack.c.2.s8 %v425
    %v1031 = vunpack.c.2.s8 %v426
    %v1032 = vunpack.c.2.s8 %v427
    %v1033 = vunpack.c.3.s8 %v423
    %v1034 = vunpack.c.3.s8 %v424
    %v1035 = vunpack.c.3.s8 %v425
    %v1036 = vunpack.c.3.s8 %v426
    %v1037 = vunpack.c.3.s8 %v427
    %v1038 = vunpack.c.0.s8 %v428
    %v1039 = vunpack.c.0.s8 %v429
    %v1040 = vunpack.c.0.s8 %v430
    %v1041 = vunpack.c.0.s8 %v431
    %v1042 = vunpack.c.0.s8 %v432
    %v1043 = vunpack.c.1.s8 %v428
    %v1044 = vunpack.c.1.s8 %v429
    %v1045 = vunpack.c.1.s8 %v430
    %v1046 = vunpack.c.1.s8 %v431
    %v1047 = vunpack.c.1.s8 %v432
    %v1048 = vunpack.c.2.s8 %v428
    %v1049 = vunpack.c.2.s8 %v429
    %v1050 = vunpack.c.2.s8 %v430
    %v1051 = vunpack.c.2.s8 %v431
    %v1052 = vunpack.c.2.s8 %v432
    %v1053 = vunpack.c.3.s8 %v428
    %v1054 = vunpack.c.3.s8 %v429
    %v1055 = vunpack.c.3.s8 %v430
    %v1056 = vunpack.c.3.s8 %v431
    %v1057 = vunpack.c.3.s8 %v432
    %v1058 = vunpack.c.0.s8 %v433
    %v1059 = vunpack.c.0.s8 %v434
    %v1060 = vunpack.c.0.s8 %v435
    %v1061 = vunpack.c.0.s8 %v436
    %v1062 = vunpack.c.0.s8 %v437
    %v1063 = vunpack.c.1.s8 %v433
    %v1064 = vunpack.c.1.s8 %v434
    %v1065 = vunpack.c.1.s8 %v435
    %v1066 = vunpack.c.1.s8 %v436
    %v1067 = vunpack.c.1.s8 %v437
    %v1068 = vunpack.c.2.s8 %v433
    %v1069 = vunpack.c.2.s8 %v434
    %v1070 = vunpack.c.2.s8 %v435
    %v1071 = vunpack.c.2.s8 %v436
    %v1072 = vunpack.c.2.s8 %v437
    %v1073 = vunpack.c.3.s8 %v433
    %v1074 = vunpack.c.3.s8 %v434
    %v1075 = vunpack.c.3.s8 %v435
    %v1076 = vunpack.c.3.s8 %v436
    %v1077 = vunpack.c.3.s8 %v437
    %v1078 = vcvt.s32.f32 %v438
    %v1079 = vcvt.s32.f32 %v439
    %v1080 = vcvt.s32.f32 %v440
    %v1081 = vcvt.s32.f32 %v441
    %v1082 = vcvt.s32.f32 %v442
    %v1083 = vcvt.s32.f32 %v443
    %v1084 = vcvt.s32.f32 %v444
    %v1085 = vcvt.s32.f32 %v445
    %v1086 = vcvt.s32.f32 %v446
    %v1087 = vcvt.s32.f32 %v447
    %v1088 = vcvt.s32.f32 %v448
    %v1089 = vcvt.s32.f32 %v449
    %v1090 = vcvt.s32.f32 %v450
    %v1091 = vcvt.s32.f32 %v451
    %v1092 = vcvt.s32.f32 %v452
    %v1093 = vcvt.s32.f32 %v453
    %v1094 = vcvt.s32.f32 %v454
    %v1095 = vcvt.s32.f32 %v455
    %v1096 = vcvt.s32.f32 %v456
    %v1097 = vcvt.s32.f32 %v457
    %v1098 = vcvt.s32.f32 %v458
    %v1099 = vcvt.s32.f32 %v459
    %v1100 = vcvt.s32.f32 %v460
    %v1101 = vcvt.s32.f32 %v461
    %v1102 = vcvt.s32.f32 %v462
    %v1103 = vcvt.s32.f32 %v463
    %v1104 = vcvt.s32.f32 %v464
    %v1105 = vcvt.s32.f32 %v465
    %v1106 = vcvt.s32.f32 %v466
    %v1107 = vcvt.s32.f32 %v467
    %v1108 = vcvt.s32.f32 %v468
    %v1109 = vcvt.s32.f32 %v469
    %v1110 = vcvt.s32.f32 %v470
    %v1111 = vcvt.s32.f32 %v471
    %v1112 = vcvt.s32.f32 %v472
    %v1113 = vcvt.s32.f32 %v473
    %v1114 = vcvt.s32.f32 %v474
    %v1115 = vcvt.s32.f32 %v475
    %v1116 = vcvt.s32.f32 %v476
    %v1117 = vcvt.s32.f32 %v477
    %v1118 = vcvt.s32.f32 %v478
    %v1119 = vcvt.s32.f32 %v479
    %v1120 = vcvt.s32.f32 %v480
    %v1121 = vcvt.s32.f32 %v481
    %v1122 = vcvt.s32.f32 %v482
    %v1123 = vcvt.s32.f32 %v483
    %v1124 = vcvt.s32.f32 %v484
    %v1125 = vcvt.s32.f32 %v485
    %v1126 = vcvt.s32.f32 %v486
    %v1127 = vcvt.s32.f32 %v487
    %v1128 = vcvt.s32.f32 %v488
    %v1129 = vcvt.s32.f32 %v489
    %v1130 = vcvt.s32.f32 %v490
    %v1131 = vcvt.s32.f32 %v491
    %v1132 = vcvt.s32.f32 %v492
    %v1133 = vcvt.s32.f32 %v493
    %v1134 = vcvt.s32.f32 %v494
    %v1135 = vcvt.s32.f32 %v495
    %v1136 = vcvt.s32.f32 %v496
    %v1137 = vcvt.s32.f32 %v497
    %v1138 = vcvt.s32.f32 %v498
    %v1139 = vcvt.s32.f32 %v499
    %v1140 = vcvt.s32.f32 %v500
    %v1141 = vcvt.s32.f32 %v501
    %v1142 = vcvt.s32.f32 %v502
    %v1143 = vcvt.s32.f32 %v503
    %v1144 = vcvt.s32.f32 %v504
    %v1145 = vcvt.s32.f32 %v505
    %v1146 = vcvt.s32.f32 %v506
    %v1147 = vcvt.s32.f32 %v507
    %v1148 = vcvt.s32.f32 %v508
    %v1149 = vcvt.s32.f32 %v509
    %v1150 = vcvt.s32.f32 %v510
    %v1151 = vcvt.s32.f32 %v511
    %v1152 = vcvt.s32.f32 %v512
    %v1153 = vcvt.s32.f32 %v513
    %v1154 = vcvt.s32.f32 %v514
    %v1155 = vcvt.s32.f32 %v515
    %v1156 = vcvt.s32.f32 %v516
    %v1157 = vcvt.s32.f32 %v517
    %v1158 = vcvt.s32.f32 %v518
    %v1159 = vcvt.s32.f32 %v519
    %v1160 = vcvt.s32.f32 %v520
    %v1161 = vcvt.s32.f32 %v521
    %v1162 = vcvt.s32.f32 %v522
    %v1163 = vcvt.s32.f32 %v523
    %v1164 = vcvt.s32.f32 %v524
    %v1165 = vcvt.s32.f32 %v525
    %v1166 = vcvt.s32.f32 %v526
    %v1167 = vcvt.s32.f32 %v527
    %v1168 = vcvt.s32.f32 %v528
    %v1169 = vcvt.s32.f32 %v529
    %v1170 = vcvt.s32.f32 %v530
    %v1171 = vcvt.s32.f32 %v531
    %v1172 = vcvt.s32.f32 %v532
    %v1173 = vcvt.s32.f32 %v533
    %v1174 = vcvt.s32.f32 %v534
    %v1175 = vcvt.s32.f32 %v535
    %v1176 = vcvt.s32.f32 %v536
    %v1177 = vcvt.s32.f32 %v537
    %v1178 = vcvt.s32.f32 %v538
    %v1179 = vcvt.s32.f32 %v539
    %v1180 = vcvt.s32.f32 %v540
    %v1181 = vcvt.s32.f32 %v541
    %v1182 = vcvt.s32.f32 %v542
    %v1183 = vcvt.s32.f32 %v543
    %v1184 = vcvt.s32.f32 %v544
    %v1185 = vcvt.s32.f32 %v545
    %v1186 = vcvt.s32.f32 %v546
    %v1187 = vcvt.s32.f32 %v547
    %v1188 = vcvt.s32.f32 %v548
    %v1189 = vcvt.s32.f32 %v549
    %v1190 = vcvt.s32.f32 %v550
    %v1191 = vcvt.s32.f32 %v551
    %v1192 = vcvt.s32.f32 %v552
    %v1193 = vcvt.s32.f32 %v553
    %v1194 = vcvt.s32.f32 %v554
    %v1195 = vcvt.s32.f32 %v555
    %v1196 = vcvt.s32.f32 %v556
    %v1197 = vcvt.s32.f32 %v557
    %v1198 = vcvt.s32.f32 %v558
    %v1199 = vcvt.s32.f32 %v559
    %v1200 = vcvt.s32.f32 %v560
    %v1201 = vcvt.s32.f32 %v561
    %v1202 = vcvt.s32.f32 %v562
    %v1203 = vcvt.s32.f32 %v563
    %v1204 = vcvt.s32.f32 %v564
    %v1205 = vcvt.s32.f32 %v565
    %v1206 = vcvt.s32.f32 %v566
    %v1207 = vcvt.s32.f32 %v567
    %v1208 = vcvt.s32.f32 %v568
    %v1209 = vcvt.s32.f32 %v569
    %v1210 = vcvt.s32.f32 %v570
    %v1211 = vcvt.s32.f32 %v571
    %v1212 = vcvt.s32.f32 %v572
    %v1213 = vcvt.s32.f32 %v573
    %v1214 = vcvt.s32.f32 %v574
    %v1215 = vcvt.s32.f32 %v575
    %v1216 = vcvt.s32.f32 %v576
    %v1217 = vcvt.s32.f32 %v577
    %v1218 = vcvt.s32.f32 %v578
    %v1219 = vcvt.s32.f32 %v579
    %v1220 = vcvt.s32.f32 %v580
    %v1221 = vcvt.s32.f32 %v581
    %v1222 = vcvt.s32.f32 %v582
    %v1223 = vcvt.s32.f32 %v583
    %v1224 = vcvt.s32.f32 %v584
    %v1225 = vcvt.s32.f32 %v585
    %v1226 = vcvt.s32.f32 %v586
    %v1227 = vcvt.s32.f32 %v587
    %v1228 = vcvt.s32.f32 %v588
    %v1229 = vcvt.s32.f32 %v589
    %v1230 = vcvt.s32.f32 %v590
    %v1231 = vcvt.s32.f32 %v591
    %v1232 = vcvt.s32.f32 %v592
    %v1233 = vcvt.s32.f32 %v593
    %v1234 = vcvt.s32.f32 %v594
    %v1235 = vcvt.s32.f32 %v595
    %v1236 = vcvt.s32.f32 %v596
    %v1237 = vcvt.s32.f32 %v597
    %v1238 = vcvt.s32.f32 %v598
    %v1239 = vcvt.s32.f32 %v599
    %v1240 = vcvt.s32.f32 %v600
    %v1241 = vcvt.s32.f32 %v601
    %v1242 = vcvt.s32.f32 %v602
    %v1243 = vcvt.s32.f32 %v603
    %v1244 = vcvt.s32.f32 %v604
    %v1245 = vcvt.s32.f32 %v605
    %v1246 = vcvt.s32.f32 %v606
    %v1247 = vcvt.s32.f32 %v607
    %v1248 = vcvt.s32.f32 %v608
    %v1249 = vcvt.s32.f32 %v609
    %v1250 = vcvt.s32.f32 %v610
    %v1251 = vcvt.s32.f32 %v611
    %v1252 = vcvt.s32.f32 %v612
    %v1253 = vcvt.s32.f32 %v613
    %v1254 = vcvt.s32.f32 %v614
    %v1255 = vcvt.s32.f32 %v615
    %v1256 = vcvt.s32.f32 %v616
    %v1257 = vcvt.s32.f32 %v617
    %v1258 = vcvt.s32.f32 %v618
    %v1259 = vcvt.s32.f32 %v619
    %v1260 = vcvt.s32.f32 %v620
    %v1261 = vcvt.s32.f32 %v621
    %v1262 = vcvt.s32.f32 %v622
    %v1263 = vcvt.s32.f32 %v623
    %v1264 = vcvt.s32.f32 %v624
    %v1265 = vcvt.s32.f32 %v625
    %v1266 = vcvt.s32.f32 %v626
    %v1267 = vcvt.s32.f32 %v627
    %v1268 = vcvt.s32.f32 %v628
    %v1269 = vcvt.s32.f32 %v629
    %v1270 = vcvt.s32.f32 %v630
    %v1271 = vcvt.s32.f32 %v631
    %v1272 = vcvt.s32.f32 %v632
    %v1273 = vcvt.s32.f32 %v633
    %v1274 = vcvt.s32.f32 %v634
    %v1275 = vcvt.s32.f32 %v635
    %v1276 = vcvt.s32.f32 %v636
    %v1277 = vcvt.s32.f32 %v637
    %v1278 = vcvt.s32.f32 %v638
    %v1279 = vcvt.s32.f32 %v639
    %v1280 = vcvt.s32.f32 %v640
    %v1281 = vcvt.s32.f32 %v641
    %v1282 = vcvt.s32.f32 %v642
    %v1283 = vcvt.s32.f32 %v643
    %v1284 = vcvt.s32.f32 %v644
    %v1285 = vcvt.s32.f32 %v645
    %v1286 = vcvt.s32.f32 %v646
    %v1287 = vcvt.s32.f32 %v647
    %v1288 = vcvt.s32.f32 %v648
    %v1289 = vcvt.s32.f32 %v649
    %v1290 = vcvt.s32.f32 %v650
    %v1291 = vcvt.s32.f32 %v651
    %v1292 = vcvt.s32.f32 %v652
    %v1293 = vcvt.s32.f32 %v653
    %v1294 = vcvt.s32.f32 %v654
    %v1295 = vcvt.s32.f32 %v655
    %v1296 = vcvt.s32.f32 %v656
    %v1297 = vcvt.s32.f32 %v657
    %v1298 = vcvt.s32.f32 %v658
    %v1299 = vcvt.s32.f32 %v659
    %v1300 = vcvt.s32.f32 %v660
    %v1301 = vcvt.s32.f32 %v661
    %v1302 = vcvt.s32.f32 %v662
    %v1303 = vcvt.s32.f32 %v663
    %v1304 = vcvt.s32.f32 %v664
    %v1305 = vcvt.s32.f32 %v665
    %v1306 = vcvt.s32.f32 %v666
    %v1307 = vcvt.s32.f32 %v667
    %v1308 = vcvt.s32.f32 %v668
    %v1309 = vcvt.s32.f32 %v669
    %v1310 = vcvt.s32.f32 %v670
    %v1311 = vcvt.s32.f32 %v671
    %v1312 = vcvt.s32.f32 %v672
    %v1313 = vcvt.s32.f32 %v673
    %v1314 = vcvt.s32.f32 %v674
    %v1315 = vcvt.s32.f32 %v675
    %v1316 = vcvt.s32.f32 %v676
    %v1317 = vcvt.s32.f32 %v677
    %v1318 = vcvt.s32.f32 %v678
    %v1319 = vcvt.s32.f32 %v679
    %v1320 = vcvt.s32.f32 %v680
    %v1321 = vcvt.s32.f32 %v681
    %v1322 = vcvt.s32.f32 %v682
    %v1323 = vcvt.s32.f32 %v683
    %v1324 = vcvt.s32.f32 %v684
    %v1325 = vcvt.s32.f32 %v685
    %v1326 = vcvt.s32.f32 %v686
    %v1327 = vcvt.s32.f32 %v687
    %v1328 = vcvt.s32.f32 %v688
    %v1329 = vcvt.s32.f32 %v689
    %v1330 = vcvt.s32.f32 %v690
    %v1331 = vcvt.s32.f32 %v691
    %v1332 = vcvt.s32.f32 %v692
    %v1333 = vcvt.s32.f32 %v693
    %v1334 = vcvt.s32.f32 %v694
    %v1335 = vcvt.s32.f32 %v695
    %v1336 = vcvt.s32.f32 %v696
    %v1337 = vcvt.s32.f32 %v697
    %v1338 = vcvt.s32.f32 %v698
    %v1339 = vcvt.s32.f32 %v699
    %v1340 = vcvt.s32.f32 %v700
    %v1341 = vcvt.s32.f32 %v701
    %v1342 = vcvt.s32.f32 %v702
    %v1343 = vcvt.s32.f32 %v703
    %v1344 = vcvt.s32.f32 %v704
    %v1345 = vcvt.s32.f32 %v705
    %v1346 = vcvt.s32.f32 %v706
    %v1347 = vcvt.s32.f32 %v707
    %v1348 = vcvt.s32.f32 %v708
    %v1349 = vcvt.s32.f32 %v709
    %v1350 = vcvt.s32.f32 %v710
    %v1351 = vcvt.s32.f32 %v711
    %v1352 = vcvt.s32.f32 %v712
    %v1353 = vcvt.s32.f32 %v713
    %v1354 = vcvt.s32.f32 %v714
    %v1355 = vcvt.s32.f32 %v715
    %v1356 = vcvt.s32.f32 %v716
    %v1357 = vcvt.s32.f32 %v717
    %v1358 = vcvt.s32.f32 %v718
    %v1359 = vcvt.s32.f32 %v719
    %v1360 = vcvt.s32.f32 %v720
    %v1361 = vcvt.s32.f32 %v721
    %v1362 = vcvt.s32.f32 %v722
    %v1363 = vcvt.s32.f32 %v723
    %v1364 = vcvt.s32.f32 %v724
    %v1365 = vcvt.s32.f32 %v725
    %v1366 = vcvt.s32.f32 %v726
    %v1367 = vcvt.s32.f32 %v727
    %v1368 = vcvt.s32.f32 %v728
    %v1369 = vcvt.s32.f32 %v729
    %v1370 = vcvt.s32.f32 %v730
    %v1371 = vcvt.s32.f32 %v731
    %v1372 = vcvt.s32.f32 %v732
    %v1373 = vcvt.s32.f32 %v733
    %v1374 = vcvt.s32.f32 %v734
    %v1375 = vcvt.s32.f32 %v735
    %v1376 = vcvt.s32.f32 %v736
    %v1377 = vcvt.s32.f32 %v737
    %v1378 = vcvt.s32.f32 %v738
    %v1379 = vcvt.s32.f32 %v739
    %v1380 = vcvt.s32.f32 %v740
    %v1381 = vcvt.s32.f32 %v741
    %v1382 = vcvt.s32.f32 %v742
    %v1383 = vcvt.s32.f32 %v743
    %v1384 = vcvt.s32.f32 %v744
    %v1385 = vcvt.s32.f32 %v745
    %v1386 = vcvt.s32.f32 %v746
    %v1387 = vcvt.s32.f32 %v747
    %v1388 = vcvt.s32.f32 %v748
    %v1389 = vcvt.s32.f32 %v749
    %v1390 = vcvt.s32.f32 %v750
    %v1391 = vcvt.s32.f32 %v751
    %v1392 = vcvt.s32.f32 %v752
    %v1393 = vcvt.s32.f32 %v753
    %v1394 = vcvt.s32.f32 %v754
    %v1395 = vcvt.s32.f32 %v755
    %v1396 = vcvt.s32.f32 %v756
    %v1397 = vcvt.s32.f32 %v757
    %v1398 = vcvt.s32.f32 %v758
    %v1399 = vcvt.s32.f32 %v759
    %v1400 = vcvt.s32.f32 %v760
    %v1401 = vcvt.s32.f32 %v761
    %v1402 = vcvt.s32.f32 %v762
    %v1403 = vcvt.s32.f32 %v763
    %v1404 = vcvt.s32.f32 %v764
    %v1405 = vcvt.s32.f32 %v765
    %v1406 = vcvt.s32.f32 %v766
    %v1407 = vcvt.s32.f32 %v767
    %v1408 = vcvt.s32.f32 %v768
    %v1409 = vcvt.s32.f32 %v769
    %v1410 = vcvt.s32.f32 %v770
    %v1411 = vcvt.s32.f32 %v771
    %v1412 = vcvt.s32.f32 %v772
    %v1413 = vcvt.s32.f32 %v773
    %v1414 = vcvt.s32.f32 %v774
    %v1415 = vcvt.s32.f32 %v775
    %v1416 = vcvt.s32.f32 %v776
    %v1417 = vcvt.s32.f32 %v777
    %v1418 = vcvt.s32.f32 %v778
    %v1419 = vcvt.s32.f32 %v779
    %v1420 = vcvt.s32.f32 %v780
    %v1421 = vcvt.s32.f32 %v781
    %v1422 = vcvt.s32.f32 %v782
    %v1423 = vcvt.s32.f32 %v783
    %v1424 = vcvt.s32.f32 %v784
    %v1425 = vcvt.s32.f32 %v785
    %v1426 = vcvt.s32.f32 %v786
    %v1427 = vcvt.s32.f32 %v787
    %v1428 = vcvt.s32.f32 %v788
    %v1429 = vcvt.s32.f32 %v789
    %v1430 = vcvt.s32.f32 %v790
    %v1431 = vcvt.s32.f32 %v791
    %v1432 = vcvt.s32.f32 %v792
    %v1433 = vcvt.s32.f32 %v793
    %v1434 = vcvt.s32.f32 %v794
    %v1435 = vcvt.s32.f32 %v795
    %v1436 = vcvt.s32.f32 %v796
    %v1437 = vcvt.s32.f32 %v797
    %v1438 = vcvt.s32.f32 %v798
    %v1439 = vcvt.s32.f32 %v799
    %v1440 = vcvt.s32.f32 %v800
    %v1441 = vcvt.s32.f32 %v801
    %v1442 = vcvt.s32.f32 %v802
    %v1443 = vcvt.s32.f32 %v803
    %v1444 = vcvt.s32.f32 %v804
    %v1445 = vcvt.s32.f32 %v805
    %v1446 = vcvt.s32.f32 %v806
    %v1447 = vcvt.s32.f32 %v807
    %v1448 = vcvt.s32.f32 %v808
    %v1449 = vcvt.s32.f32 %v809
    %v1450 = vcvt.s32.f32 %v810
    %v1451 = vcvt.s32.f32 %v811
    %v1452 = vcvt.s32.f32 %v812
    %v1453 = vcvt.s32.f32 %v813
    %v1454 = vcvt.s32.f32 %v814
    %v1455 = vcvt.s32.f32 %v815
    %v1456 = vcvt.s32.f32 %v816
    %v1457 = vcvt.s32.f32 %v817
    %v1458 = vcvt.s32.f32 %v818
    %v1459 = vcvt.s32.f32 %v819
    %v1460 = vcvt.s32.f32 %v820
    %v1461 = vcvt.s32.f32 %v821
    %v1462 = vcvt.s32.f32 %v822
    %v1463 = vcvt.s32.f32 %v823
    %v1464 = vcvt.s32.f32 %v824
    %v1465 = vcvt.s32.f32 %v825
    %v1466 = vcvt.s32.f32 %v826
    %v1467 = vcvt.s32.f32 %v827
    %v1468 = vcvt.s32.f32 %v828
    %v1469 = vcvt.s32.f32 %v829
    %v1470 = vcvt.s32.f32 %v830
    %v1471 = vcvt.s32.f32 %v831
    %v1472 = vcvt.s32.f32 %v832
    %v1473 = vcvt.s32.f32 %v833
    %v1474 = vcvt.s32.f32 %v834
    %v1475 = vcvt.s32.f32 %v835
    %v1476 = vcvt.s32.f32 %v836
    %v1477 = vcvt.s32.f32 %v837
    %v1478 = vcvt.s32.f32 %v838
    %v1479 = vcvt.s32.f32 %v839
    %v1480 = vcvt.s32.f32 %v840
    %v1481 = vcvt.s32.f32 %v841
    %v1482 = vcvt.s32.f32 %v842
    %v1483 = vcvt.s32.f32 %v843
    %v1484 = vcvt.s32.f32 %v844
    %v1485 = vcvt.s32.f32 %v845
    %v1486 = vcvt.s32.f32 %v846
    %v1487 = vcvt.s32.f32 %v847
    %v1488 = vcvt.s32.f32 %v848
    %v1489 = vcvt.s32.f32 %v849
    %v1490 = vcvt.s32.f32 %v850
    %v1491 = vcvt.s32.f32 %v851
    %v1492 = vcvt.s32.f32 %v852
    %v1493 = vcvt.s32.f32 %v853
    %v1494 = vcvt.s32.f32 %v854
    %v1495 = vcvt.s32.f32 %v855
    %v1496 = vcvt.s32.f32 %v856
    %v1497 = vcvt.s32.f32 %v857
    %v1498 = vcvt.s32.f32 %v858
    %v1499 = vcvt.s32.f32 %v859
    %v1500 = vcvt.s32.f32 %v860
    %v1501 = vcvt.s32.f32 %v861
    %v1502 = vcvt.s32.f32 %v862
    %v1503 = vcvt.s32.f32 %v863
    %v1504 = vcvt.s32.f32 %v864
    %v1505 = vcvt.s32.f32 %v865
    %v1506 = vcvt.s32.f32 %v866
    %v1507 = vcvt.s32.f32 %v867
    %v1508 = vcvt.s32.f32 %v868
    %v1509 = vcvt.s32.f32 %v869
    %v1510 = vcvt.s32.f32 %v870
    %v1511 = vcvt.s32.f32 %v871
    %v1512 = vcvt.s32.f32 %v872
    %v1513 = vcvt.s32.f32 %v873
    %v1514 = vcvt.s32.f32 %v874
    %v1515 = vcvt.s32.f32 %v875
    %v1516 = vcvt.s32.f32 %v876
    %v1517 = vcvt.s32.f32 %v877
    %v1518 = vcvt.s32.f32 %v878
    %v1519 = vcvt.s32.f32 %v879
    %v1520 = vcvt.s32.f32 %v880
    %v1521 = vcvt.s32.f32 %v881
    %v1522 = vcvt.s32.f32 %v882
    %v1523 = vcvt.s32.f32 %v883
    %v1524 = vcvt.s32.f32 %v884
    %v1525 = vcvt.s32.f32 %v885
    %v1526 = vcvt.s32.f32 %v886
    %v1527 = vcvt.s32.f32 %v887
    %v1528 = vcvt.s32.f32 %v888
    %v1529 = vcvt.s32.f32 %v889
    %v1530 = vcvt.s32.f32 %v890
    %v1531 = vcvt.s32.f32 %v891
    %v1532 = vcvt.s32.f32 %v892
    %v1533 = vcvt.s32.f32 %v893
    %v1534 = vcvt.s32.f32 %v894
    %v1535 = vcvt.s32.f32 %v895
    %v1536 = vcvt.s32.f32 %v896
    %v1537 = vcvt.s32.f32 %v897
    %v1538 = vcvt.s32.f32 %v898
    %v1539 = vcvt.s32.f32 %v899
    %v1540 = vcvt.s32.f32 %v900
    %v1541 = vcvt.s32.f32 %v901
    %v1542 = vcvt.s32.f32 %v902
    %v1543 = vcvt.s32.f32 %v903
    %v1544 = vcvt.s32.f32 %v904
    %v1545 = vcvt.s32.f32 %v905
    %v1546 = vcvt.s32.f32 %v906
    %v1547 = vcvt.s32.f32 %v907
    %v1548 = vcvt.s32.f32 %v908
    %v1549 = vcvt.s32.f32 %v909
    %v1550 = vcvt.s32.f32 %v910
    %v1551 = vcvt.s32.f32 %v911
    %v1552 = vcvt.s32.f32 %v912
    %v1553 = vcvt.s32.f32 %v913
    %v1554 = vcvt.s32.f32 %v914
    %v1555 = vcvt.s32.f32 %v915
    %v1556 = vcvt.s32.f32 %v916
    %v1557 = vcvt.s32.f32 %v917
    %v1558 = vcvt.s32.f32 %v918
    %v1559 = vcvt.s32.f32 %v919
    %v1560 = vcvt.s32.f32 %v920
    %v1561 = vcvt.s32.f32 %v921
    %v1562 = vcvt.s32.f32 %v922
    %v1563 = vcvt.s32.f32 %v923
    %v1564 = vcvt.s32.f32 %v924
    %v1565 = vcvt.s32.f32 %v925
    %v1566 = vcvt.s32.f32 %v926
    %v1567 = vcvt.s32.f32 %v927
    %v1568 = vcvt.s32.f32 %v928
    %v1569 = vcvt.s32.f32 %v929
    %v1570 = vcvt.s32.f32 %v930
    %v1571 = vcvt.s32.f32 %v931
    %v1572 = vcvt.s32.f32 %v932
    %v1573 = vcvt.s32.f32 %v933
    %v1574 = vcvt.s32.f32 %v934
    %v1575 = vcvt.s32.f32 %v935
    %v1576 = vcvt.s32.f32 %v936
    %v1577 = vcvt.s32.f32 %v937
    %v1578 = vcvt.s32.f32 %v938
    %v1579 = vcvt.s32.f32 %v939
    %v1580 = vcvt.s32.f32 %v940
    %v1581 = vcvt.s32.f32 %v941
    %v1582 = vcvt.s32.f32 %v942
    %v1583 = vcvt.s32.f32 %v943
    %v1584 = vcvt.s32.f32 %v944
    %v1585 = vcvt.s32.f32 %v945
    %v1586 = vcvt.s32.f32 %v946
    %v1587 = vcvt.s32.f32 %v947
    %v1588 = vcvt.s32.f32 %v948
    %v1589 = vcvt.s32.f32 %v949
    %v1590 = vcvt.s32.f32 %v950
    %v1591 = vcvt.s32.f32 %v951
    %v1592 = vcvt.s32.f32 %v952
    %v1593 = vcvt.s32.f32 %v953
    %v1594 = vcvt.s32.f32 %v954
    %v1595 = vcvt.s32.f32 %v955
    %v1596 = vcvt.s32.f32 %v956
    %v1597 = vcvt.s32.f32 %v957
    %v1598 = vcvt.s32.f32 %v958
    %v1599 = vcvt.s32.f32 %v959
    %v1600 = vcvt.s32.f32 %v960
    %v1601 = vcvt.s32.f32 %v961
    %v1602 = vcvt.s32.f32 %v962
    %v1603 = vcvt.s32.f32 %v963
    %v1604 = vcvt.s32.f32 %v964
    %v1605 = vcvt.s32.f32 %v965
    %v1606 = vcvt.s32.f32 %v966
    %v1607 = vcvt.s32.f32 %v967
    %v1608 = vcvt.s32.f32 %v968
    %v1609 = vcvt.s32.f32 %v969
    %v1610 = vcvt.s32.f32 %v970
    %v1611 = vcvt.s32.f32 %v971
    %v1612 = vcvt.s32.f32 %v972
    %v1613 = vcvt.s32.f32 %v973
    %v1614 = vcvt.s32.f32 %v974
    %v1615 = vcvt.s32.f32 %v975
    %v1616 = vcvt.s32.f32 %v976
    %v1617 = vcvt.s32.f32 %v977
    %v1618 = vcvt.s32.f32 %v978
    %v1619 = vcvt.s32.f32 %v979
    %v1620 = vcvt.s32.f32 %v980
    %v1621 = vcvt.s32.f32 %v981
    %v1622 = vcvt.s32.f32 %v982
    %v1623 = vcvt.s32.f32 %v983
    %v1624 = vcvt.s32.f32 %v984
    %v1625 = vcvt.s32.f32 %v985
    %v1626 = vcvt.s32.f32 %v986
    %v1627 = vcvt.s32.f32 %v987
    %v1628 = vcvt.s32.f32 %v988
    %v1629 = vcvt.s32.f32 %v989
    %v1630 = vcvt.s32.f32 %v990
    %v1631 = vcvt.s32.f32 %v991
    %v1632 = vcvt.s32.f32 %v992
    %v1633 = vcvt.s32.f32 %v993
    %v1634 = vcvt.s32.f32 %v994
    %v1635 = vcvt.s32.f32 %v995
    %v1636 = vcvt.s32.f32 %v996
    %v1637 = vcvt.s32.f32 %v997
    %v1638 = vcvt.s32.f32 %v998
    %v1639 = vcvt.s32.f32 %v999
    %v1640 = vcvt.s32.f32 %v1000
    %v1641 = vcvt.s32.f32 %v1001
    %v1642 = vcvt.s32.f32 %v1002
    %v1643 = vcvt.s32.f32 %v1003
    %v1644 = vcvt.s32.f32 %v1004
    %v1645 = vcvt.s32.f32 %v1005
    %v1646 = vcvt.s32.f32 %v1006
    %v1647 = vcvt.s32.f32 %v1007
    %v1648 = vcvt.s32.f32 %v1008
    %v1649 = vcvt.s32.f32 %v1009
    %v1650 = vcvt.s32.f32 %v1010
    %v1651 = vcvt.s32.f32 %v1011
    %v1652 = vcvt.s32.f32 %v1012
    %v1653 = vcvt.s32.f32 %v1013
    %v1654 = vcvt.s32.f32 %v1014
    %v1655 = vcvt.s32.f32 %v1015
    %v1656 = vcvt.s32.f32 %v1016
    %v1657 = vcvt.s32.f32 %v1017
    %v1658 = vcvt.s32.f32 %v1018
    %v1659 = vcvt.s32.f32 %v1019
    %v1660 = vcvt.s32.f32 %v1020
    %v1661 = vcvt.s32.f32 %v1021
    %v1662 = vcvt.s32.f32 %v1022
    %v1663 = vcvt.s32.f32 %v1023
    %v1664 = vcvt.s32.f32 %v1024
    %v1665 = vcvt.s32.f32 %v1025
    %v1666 = vcvt.s32.f32 %v1026
    %v1667 = vcvt.s32.f32 %v1027
    %v1668 = vcvt.s32.f32 %v1028
    %v1669 = vcvt.s32.f32 %v1029
    %v1670 = vcvt.s32.f32 %v1030
    %v1671 = vcvt.s32.f32 %v1031
    %v1672 = vcvt.s32.f32 %v1032
    %v1673 = vcvt.s32.f32 %v1033
    %v1674 = vcvt.s32.f32 %v1034
    %v1675 = vcvt.s32.f32 %v1035
    %v1676 = vcvt.s32.f32 %v1036
    %v1677 = vcvt.s32.f32 %v1037
    %v1678 = vcvt.s32.f32 %v1038
    %v1679 = vcvt.s32.f32 %v1039
    %v1680 = vcvt.s32.f32 %v1040
    %v1681 = vcvt.s32.f32 %v1041
    %v1682 = vcvt.s32.f32 %v1042
    %v1683 = vcvt.s32.f32 %v1043
    %v1684 = vcvt.s32.f32 %v1044
    %v1685 = vcvt.s32.f32 %v1045
    %v1686 = vcvt.s32.f32 %v1046
    %v1687 = vcvt.s32.f32 %v1047
    %v1688 = vcvt.s32.f32 %v1048
    %v1689 = vcvt.s32.f32 %v1049
    %v1690 = vcvt.s32.f32 %v1050
    %v1691 = vcvt.s32.f32 %v1051
    %v1692 = vcvt.s32.f32 %v1052
    %v1693 = vcvt.s32.f32 %v1053
    %v1694 = vcvt.s32.f32 %v1054
    %v1695 = vcvt.s32.f32 %v1055
    %v1696 = vcvt.s32.f32 %v1056
    %v1697 = vcvt.s32.f32 %v1057
    %v1698 = vcvt.s32.f32 %v1058
    %v1699 = vcvt.s32.f32 %v1059
    %v1700 = vcvt.s32.f32 %v1060
    %v1701 = vcvt.s32.f32 %v1061
    %v1702 = vcvt.s32.f32 %v1062
    %v1703 = vcvt.s32.f32 %v1063
    %v1704 = vcvt.s32.f32 %v1064
    %v1705 = vcvt.s32.f32 %v1065
    %v1706 = vcvt.s32.f32 %v1066
    %v1707 = vcvt.s32.f32 %v1067
    %v1708 = vcvt.s32.f32 %v1068
    %v1709 = vcvt.s32.f32 %v1069
    %v1710 = vcvt.s32.f32 %v1070
    %v1711 = vcvt.s32.f32 %v1071
    %v1712 = vcvt.s32.f32 %v1072
    %v1713 = vcvt.s32.f32 %v1073
    %v1714 = vcvt.s32.f32 %v1074
    %v1715 = vcvt.s32.f32 %v1075
    %v1716 = vcvt.s32.f32 %v1076
    %v1717 = vcvt.s32.f32 %v1077
    %v1718 = vpack.c.bf16 %v1083, %v1078
    %v1719 = vpack.c.bf16 %v1084, %v1079
    %v1720 = vpack.c.bf16 %v1085, %v1080
    %v1721 = vpack.c.bf16 %v1086, %v1081
    %v1722 = vpack.c.bf16 %v1087, %v1082
    %v1723 = vpack.c.bf16 %v1093, %v1088
    %v1724 = vpack.c.bf16 %v1094, %v1089
    %v1725 = vpack.c.bf16 %v1095, %v1090
    %v1726 = vpack.c.bf16 %v1096, %v1091
    %v1727 = vpack.c.bf16 %v1097, %v1092
    %v1728 = vpack.c.bf16 %v1103, %v1098
    %v1729 = vpack.c.bf16 %v1104, %v1099
    %v1730 = vpack.c.bf16 %v1105, %v1100
    %v1731 = vpack.c.bf16 %v1106, %v1101
    %v1732 = vpack.c.bf16 %v1107, %v1102
    %v1733 = vpack.c.bf16 %v1113, %v1108
    %v1734 = vpack.c.bf16 %v1114, %v1109
    %v1735 = vpack.c.bf16 %v1115, %v1110
    %v1736 = vpack.c.bf16 %v1116, %v1111
    %v1737 = vpack.c.bf16 %v1117, %v1112
    %v1738 = vpack.c.bf16 %v1123, %v1118
    %v1739 = vpack.c.bf16 %v1124, %v1119
    %v1740 = vpack.c.bf16 %v1125, %v1120
    %v1741 = vpack.c.bf16 %v1126, %v1121
    %v1742 = vpack.c.bf16 %v1127, %v1122
    %v1743 = vpack.c.bf16 %v1133, %v1128
    %v1744 = vpack.c.bf16 %v1134, %v1129
    %v1745 = vpack.c.bf16 %v1135, %v1130
    %v1746 = vpack.c.bf16 %v1136, %v1131
    %v1747 = vpack.c.bf16 %v1137, %v1132
    %v1748 = vpack.c.bf16 %v1143, %v1138
    %v1749 = vpack.c.bf16 %v1144, %v1139
    %v1750 = vpack.c.bf16 %v1145, %v1140
    %v1751 = vpack.c.bf16 %v1146, %v1141
    %v1752 = vpack.c.bf16 %v1147, %v1142
    %v1753 = vpack.c.bf16 %v1153, %v1148
    %v1754 = vpack.c.bf16 %v1154, %v1149
    %v1755 = vpack.c.bf16 %v1155, %v1150
    %v1756 = vpack.c.bf16 %v1156, %v1151
    %v1757 = vpack.c.bf16 %v1157, %v1152
    %v1758 = vpack.c.bf16 %v1163, %v1158
    %v1759 = vpack.c.bf16 %v1164, %v1159
    %v1760 = vpack.c.bf16 %v1165, %v1160
    %v1761 = vpack.c.bf16 %v1166, %v1161
    %v1762 = vpack.c.bf16 %v1167, %v1162
    %v1763 = vpack.c.bf16 %v1173, %v1168
    %v1764 = vpack.c.bf16 %v1174, %v1169
    %v1765 = vpack.c.bf16 %v1175, %v1170
    %v1766 = vpack.c.bf16 %v1176, %v1171
    %v1767 = vpack.c.bf16 %v1177, %v1172
    %v1768 = vpack.c.bf16 %v1183, %v1178
    %v1769 = vpack.c.bf16 %v1184, %v1179
    %v1770 = vpack.c.bf16 %v1185, %v1180
    %v1771 = vpack.c.bf16 %v1186, %v1181
    %v1772 = vpack.c.bf16 %v1187, %v1182
    %v1773 = vpack.c.bf16 %v1193, %v1188
    %v1774 = vpack.c.bf16 %v1194, %v1189
    %v1775 = vpack.c.bf16 %v1195, %v1190
    %v1776 = vpack.c.bf16 %v1196, %v1191
    %v1777 = vpack.c.bf16 %v1197, %v1192
    %v1778 = vpack.c.bf16 %v1203, %v1198
    %v1779 = vpack.c.bf16 %v1204, %v1199
    %v1780 = vpack.c.bf16 %v1205, %v1200
    %v1781 = vpack.c.bf16 %v1206, %v1201
    %v1782 = vpack.c.bf16 %v1207, %v1202
    %v1783 = vpack.c.bf16 %v1213, %v1208
    %v1784 = vpack.c.bf16 %v1214, %v1209
    %v1785 = vpack.c.bf16 %v1215, %v1210
    %v1786 = vpack.c.bf16 %v1216, %v1211
    %v1787 = vpack.c.bf16 %v1217, %v1212
    %v1788 = vpack.c.bf16 %v1223, %v1218
    %v1789 = vpack.c.bf16 %v1224, %v1219
    %v1790 = vpack.c.bf16 %v1225, %v1220
    %v1791 = vpack.c.bf16 %v1226, %v1221
    %v1792 = vpack.c.bf16 %v1227, %v1222
    %v1793 = vpack.c.bf16 %v1233, %v1228
    %v1794 = vpack.c.bf16 %v1234, %v1229
    %v1795 = vpack.c.bf16 %v1235, %v1230
    %v1796 = vpack.c.bf16 %v1236, %v1231
    %v1797 = vpack.c.bf16 %v1237, %v1232
    %v1798 = vpack.c.bf16 %v1243, %v1238
    %v1799 = vpack.c.bf16 %v1244, %v1239
    %v1800 = vpack.c.bf16 %v1245, %v1240
    %v1801 = vpack.c.bf16 %v1246, %v1241
    %v1802 = vpack.c.bf16 %v1247, %v1242
    %v1803 = vpack.c.bf16 %v1253, %v1248
    %v1804 = vpack.c.bf16 %v1254, %v1249
    %v1805 = vpack.c.bf16 %v1255, %v1250
    %v1806 = vpack.c.bf16 %v1256, %v1251
    %v1807 = vpack.c.bf16 %v1257, %v1252
    %v1808 = vpack.c.bf16 %v1263, %v1258
    %v1809 = vpack.c.bf16 %v1264, %v1259
    %v1810 = vpack.c.bf16 %v1265, %v1260
    %v1811 = vpack.c.bf16 %v1266, %v1261
    %v1812 = vpack.c.bf16 %v1267, %v1262
    %v1813 = vpack.c.bf16 %v1273, %v1268
    %v1814 = vpack.c.bf16 %v1274, %v1269
    %v1815 = vpack.c.bf16 %v1275, %v1270
    %v1816 = vpack.c.bf16 %v1276, %v1271
    %v1817 = vpack.c.bf16 %v1277, %v1272
    %v1818 = vpack.c.bf16 %v1283, %v1278
    %v1819 = vpack.c.bf16 %v1284, %v1279
    %v1820 = vpack.c.bf16 %v1285, %v1280
    %v1821 = vpack.c.bf16 %v1286, %v1281
    %v1822 = vpack.c.bf16 %v1287, %v1282
    %v1823 = vpack.c.bf16 %v1293, %v1288
    %v1824 = vpack.c.bf16 %v1294, %v1289
    %v1825 = vpack.c.bf16 %v1295, %v1290
    %v1826 = vpack.c.bf16 %v1296, %v1291
    %v1827 = vpack.c.bf16 %v1297, %v1292
    %v1828 = vpack.c.bf16 %v1303, %v1298
    %v1829 = vpack.c.bf16 %v1304, %v1299
    %v1830 = vpack.c.bf16 %v1305, %v1300
    %v1831 = vpack.c.bf16 %v1306, %v1301
    %v1832 = vpack.c.bf16 %v1307, %v1302
    %v1833 = vpack.c.bf16 %v1313, %v1308
    %v1834 = vpack.c.bf16 %v1314, %v1309
    %v1835 = vpack.c.bf16 %v1315, %v1310
    %v1836 = vpack.c.bf16 %v1316, %v1311
    %v1837 = vpack.c.bf16 %v1317, %v1312
    %v1838 = vpack.c.bf16 %v1323, %v1318
    %v1839 = vpack.c.bf16 %v1324, %v1319
    %v1840 = vpack.c.bf16 %v1325, %v1320
    %v1841 = vpack.c.bf16 %v1326, %v1321
    %v1842 = vpack.c.bf16 %v1327, %v1322
    %v1843 = vpack.c.bf16 %v1333, %v1328
    %v1844 = vpack.c.bf16 %v1334, %v1329
    %v1845 = vpack.c.bf16 %v1335, %v1330
    %v1846 = vpack.c.bf16 %v1336, %v1331
    %v1847 = vpack.c.bf16 %v1337, %v1332
    %v1848 = vpack.c.bf16 %v1343, %v1338
    %v1849 = vpack.c.bf16 %v1344, %v1339
    %v1850 = vpack.c.bf16 %v1345, %v1340
    %v1851 = vpack.c.bf16 %v1346, %v1341
    %v1852 = vpack.c.bf16 %v1347, %v1342
    %v1853 = vpack.c.bf16 %v1353, %v1348
    %v1854 = vpack.c.bf16 %v1354, %v1349
    %v1855 = vpack.c.bf16 %v1355, %v1350
    %v1856 = vpack.c.bf16 %v1356, %v1351
    %v1857 = vpack.c.bf16 %v1357, %v1352
    %v1858 = vpack.c.bf16 %v1363, %v1358
    %v1859 = vpack.c.bf16 %v1364, %v1359
    %v1860 = vpack.c.bf16 %v1365, %v1360
    %v1861 = vpack.c.bf16 %v1366, %v1361
    %v1862 = vpack.c.bf16 %v1367, %v1362
    %v1863 = vpack.c.bf16 %v1373, %v1368
    %v1864 = vpack.c.bf16 %v1374, %v1369
    %v1865 = vpack.c.bf16 %v1375, %v1370
    %v1866 = vpack.c.bf16 %v1376, %v1371
    %v1867 = vpack.c.bf16 %v1377, %v1372
    %v1868 = vpack.c.bf16 %v1383, %v1378
    %v1869 = vpack.c.bf16 %v1384, %v1379
    %v1870 = vpack.c.bf16 %v1385, %v1380
    %v1871 = vpack.c.bf16 %v1386, %v1381
    %v1872 = vpack.c.bf16 %v1387, %v1382
    %v1873 = vpack.c.bf16 %v1393, %v1388
    %v1874 = vpack.c.bf16 %v1394, %v1389
    %v1875 = vpack.c.bf16 %v1395, %v1390
    %v1876 = vpack.c.bf16 %v1396, %v1391
    %v1877 = vpack.c.bf16 %v1397, %v1392
    %v1878 = vpack.c.bf16 %v1403, %v1398
    %v1879 = vpack.c.bf16 %v1404, %v1399
    %v1880 = vpack.c.bf16 %v1405, %v1400
    %v1881 = vpack.c.bf16 %v1406, %v1401
    %v1882 = vpack.c.bf16 %v1407, %v1402
    %v1883 = vpack.c.bf16 %v1413, %v1408
    %v1884 = vpack.c.bf16 %v1414, %v1409
    %v1885 = vpack.c.bf16 %v1415, %v1410
    %v1886 = vpack.c.bf16 %v1416, %v1411
    %v1887 = vpack.c.bf16 %v1417, %v1412
    %v1888 = vpack.c.bf16 %v1423, %v1418
    %v1889 = vpack.c.bf16 %v1424, %v1419
    %v1890 = vpack.c.bf16 %v1425, %v1420
    %v1891 = vpack.c.bf16 %v1426, %v1421
    %v1892 = vpack.c.bf16 %v1427, %v1422
    %v1893 = vpack.c.bf16 %v1433, %v1428
    %v1894 = vpack.c.bf16 %v1434, %v1429
    %v1895 = vpack.c.bf16 %v1435, %v1430
    %v1896 = vpack.c.bf16 %v1436, %v1431
    %v1897 = vpack.c.bf16 %v1437, %v1432
    %v1898 = vpack.c.bf16 %v1443, %v1438
    %v1899 = vpack.c.bf16 %v1444, %v1439
    %v1900 = vpack.c.bf16 %v1445, %v1440
    %v1901 = vpack.c.bf16 %v1446, %v1441
    %v1902 = vpack.c.bf16 %v1447, %v1442
    %v1903 = vpack.c.bf16 %v1453, %v1448
    %v1904 = vpack.c.bf16 %v1454, %v1449
    %v1905 = vpack.c.bf16 %v1455, %v1450
    %v1906 = vpack.c.bf16 %v1456, %v1451
    %v1907 = vpack.c.bf16 %v1457, %v1452
    %v1908 = vpack.c.bf16 %v1463, %v1458
    %v1909 = vpack.c.bf16 %v1464, %v1459
    %v1910 = vpack.c.bf16 %v1465, %v1460
    %v1911 = vpack.c.bf16 %v1466, %v1461
    %v1912 = vpack.c.bf16 %v1467, %v1462
    %v1913 = vpack.c.bf16 %v1473, %v1468
    %v1914 = vpack.c.bf16 %v1474, %v1469
    %v1915 = vpack.c.bf16 %v1475, %v1470
    %v1916 = vpack.c.bf16 %v1476, %v1471
    %v1917 = vpack.c.bf16 %v1477, %v1472
    %v1918 = vpack.c.bf16 %v1483, %v1478
    %v1919 = vpack.c.bf16 %v1484, %v1479
    %v1920 = vpack.c.bf16 %v1485, %v1480
    %v1921 = vpack.c.bf16 %v1486, %v1481
    %v1922 = vpack.c.bf16 %v1487, %v1482
    %v1923 = vpack.c.bf16 %v1493, %v1488
    %v1924 = vpack.c.bf16 %v1494, %v1489
    %v1925 = vpack.c.bf16 %v1495, %v1490
    %v1926 = vpack.c.bf16 %v1496, %v1491
    %v1927 = vpack.c.bf16 %v1497, %v1492
    %v1928 = vpack.c.bf16 %v1503, %v1498
    %v1929 = vpack.c.bf16 %v1504, %v1499
    %v1930 = vpack.c.bf16 %v1505, %v1500
    %v1931 = vpack.c.bf16 %v1506, %v1501
    %v1932 = vpack.c.bf16 %v1507, %v1502
    %v1933 = vpack.c.bf16 %v1513, %v1508
    %v1934 = vpack.c.bf16 %v1514, %v1509
    %v1935 = vpack.c.bf16 %v1515, %v1510
    %v1936 = vpack.c.bf16 %v1516, %v1511
    %v1937 = vpack.c.bf16 %v1517, %v1512
    %v1938 = vpack.c.bf16 %v1523, %v1518
    %v1939 = vpack.c.bf16 %v1524, %v1519
    %v1940 = vpack.c.bf16 %v1525, %v1520
    %v1941 = vpack.c.bf16 %v1526, %v1521
    %v1942 = vpack.c.bf16 %v1527, %v1522
    %v1943 = vpack.c.bf16 %v1533, %v1528
    %v1944 = vpack.c.bf16 %v1534, %v1529
    %v1945 = vpack.c.bf16 %v1535, %v1530
    %v1946 = vpack.c.bf16 %v1536, %v1531
    %v1947 = vpack.c.bf16 %v1537, %v1532
    %v1948 = vpack.c.bf16 %v1543, %v1538
    %v1949 = vpack.c.bf16 %v1544, %v1539
    %v1950 = vpack.c.bf16 %v1545, %v1540
    %v1951 = vpack.c.bf16 %v1546, %v1541
    %v1952 = vpack.c.bf16 %v1547, %v1542
    %v1953 = vpack.c.bf16 %v1553, %v1548
    %v1954 = vpack.c.bf16 %v1554, %v1549
    %v1955 = vpack.c.bf16 %v1555, %v1550
    %v1956 = vpack.c.bf16 %v1556, %v1551
    %v1957 = vpack.c.bf16 %v1557, %v1552
    %v1958 = vpack.c.bf16 %v1563, %v1558
    %v1959 = vpack.c.bf16 %v1564, %v1559
    %v1960 = vpack.c.bf16 %v1565, %v1560
    %v1961 = vpack.c.bf16 %v1566, %v1561
    %v1962 = vpack.c.bf16 %v1567, %v1562
    %v1963 = vpack.c.bf16 %v1573, %v1568
    %v1964 = vpack.c.bf16 %v1574, %v1569
    %v1965 = vpack.c.bf16 %v1575, %v1570
    %v1966 = vpack.c.bf16 %v1576, %v1571
    %v1967 = vpack.c.bf16 %v1577, %v1572
    %v1968 = vpack.c.bf16 %v1583, %v1578
    %v1969 = vpack.c.bf16 %v1584, %v1579
    %v1970 = vpack.c.bf16 %v1585, %v1580
    %v1971 = vpack.c.bf16 %v1586, %v1581
    %v1972 = vpack.c.bf16 %v1587, %v1582
    %v1973 = vpack.c.bf16 %v1593, %v1588
    %v1974 = vpack.c.bf16 %v1594, %v1589
    %v1975 = vpack.c.bf16 %v1595, %v1590
    %v1976 = vpack.c.bf16 %v1596, %v1591
    %v1977 = vpack.c.bf16 %v1597, %v1592
    %v1978 = vpack.c.bf16 %v1603, %v1598
    %v1979 = vpack.c.bf16 %v1604, %v1599
    %v1980 = vpack.c.bf16 %v1605, %v1600
    %v1981 = vpack.c.bf16 %v1606, %v1601
    %v1982 = vpack.c.bf16 %v1607, %v1602
    %v1983 = vpack.c.bf16 %v1613, %v1608
    %v1984 = vpack.c.bf16 %v1614, %v1609
    %v1985 = vpack.c.bf16 %v1615, %v1610
    %v1986 = vpack.c.bf16 %v1616, %v1611
    %v1987 = vpack.c.bf16 %v1617, %v1612
    %v1988 = vpack.c.bf16 %v1623, %v1618
    %v1989 = vpack.c.bf16 %v1624, %v1619
    %v1990 = vpack.c.bf16 %v1625, %v1620
    %v1991 = vpack.c.bf16 %v1626, %v1621
    %v1992 = vpack.c.bf16 %v1627, %v1622
    %v1993 = vpack.c.bf16 %v1633, %v1628
    %v1994 = vpack.c.bf16 %v1634, %v1629
    %v1995 = vpack.c.bf16 %v1635, %v1630
    %v1996 = vpack.c.bf16 %v1636, %v1631
    %v1997 = vpack.c.bf16 %v1637, %v1632
    %v1998 = vpack.c.bf16 %v1643, %v1638
    %v1999 = vpack.c.bf16 %v1644, %v1639
    %v2000 = vpack.c.bf16 %v1645, %v1640
    %v2001 = vpack.c.bf16 %v1646, %v1641
    %v2002 = vpack.c.bf16 %v1647, %v1642
    %v2003 = vpack.c.bf16 %v1653, %v1648
    %v2004 = vpack.c.bf16 %v1654, %v1649
    %v2005 = vpack.c.bf16 %v1655, %v1650
    %v2006 = vpack.c.bf16 %v1656, %v1651
    %v2007 = vpack.c.bf16 %v1657, %v1652
    %v2008 = vpack.c.bf16 %v1663, %v1658
    %v2009 = vpack.c.bf16 %v1664, %v1659
    %v2010 = vpack.c.bf16 %v1665, %v1660
    %v2011 = vpack.c.bf16 %v1666, %v1661
    %v2012 = vpack.c.bf16 %v1667, %v1662
    %v2013 = vpack.c.bf16 %v1673, %v1668
    %v2014 = vpack.c.bf16 %v1674, %v1669
    %v2015 = vpack.c.bf16 %v1675, %v1670
    %v2016 = vpack.c.bf16 %v1676, %v1671
    %v2017 = vpack.c.bf16 %v1677, %v1672
    %v2018 = vpack.c.bf16 %v1683, %v1678
    %v2019 = vpack.c.bf16 %v1684, %v1679
    %v2020 = vpack.c.bf16 %v1685, %v1680
    %v2021 = vpack.c.bf16 %v1686, %v1681
    %v2022 = vpack.c.bf16 %v1687, %v1682
    %v2023 = vpack.c.bf16 %v1693, %v1688
    %v2024 = vpack.c.bf16 %v1694, %v1689
    %v2025 = vpack.c.bf16 %v1695, %v1690
    %v2026 = vpack.c.bf16 %v1696, %v1691
    %v2027 = vpack.c.bf16 %v1697, %v1692
    %v2028 = vpack.c.bf16 %v1703, %v1698
    %v2029 = vpack.c.bf16 %v1704, %v1699
    %v2030 = vpack.c.bf16 %v1705, %v1700
    %v2031 = vpack.c.bf16 %v1706, %v1701
    %v2032 = vpack.c.bf16 %v1707, %v1702
    %v2033 = vpack.c.bf16 %v1713, %v1708
    %v2034 = vpack.c.bf16 %v1714, %v1709
    %v2035 = vpack.c.bf16 %v1715, %v1710
    %v2036 = vpack.c.bf16 %v1716, %v1711
    %v2037 = vpack.c.bf16 %v1717, %v1712
    %v2038 = vpack.c.bf16 %v270, %v270
    %v2039 = vpack.c.bf16 %v271, %v271
    %v2040 = vpack.c.bf16 %v272, %v272
    %v2041 = vpack.c.bf16 %v273, %v273
    %v2042 = vpack.c.bf16 %v274, %v274
    %v2043 = vpack.c.bf16 %v275, %v275
    %v2044 = vpack.c.bf16 %v276, %v276
    %v2045 = vpack.c.bf16 %v277, %v277
    %2046 = vmatpush.bf16.msra.mxu0 %v1753
    %2047 = vmatpush.bf16.msra.mxu0 %v1748
    %2048 = vmatpush.bf16.msra.mxu0 %v1743
    %2049 = vmatpush.bf16.msra.mxu0 %v1738
    %2050 = vmatpush.bf16.msra.mxu0 %v1733
    %2051 = vmatpush.bf16.msra.mxu0 %v1728
    %2052 = vmatpush.bf16.msra.mxu0 %v1723
    %2053 = vmatpush.bf16.msra.mxu0 %v1718
    %2054 = vmatmul.bf16.gmra.mxu0 %v2038
    %v2055 = vpop.f32.mrf.mxu0
    %v2056 = vadd.f32 0.0, %v2055
    %v2057 = vpop.f32.mrf.mxu0
    %2058 = vdwg.mxu0
    %2059 = vmatpush.bf16.msra.mxu0 %v1793
    %2060 = vmatpush.bf16.msra.mxu0 %v1788
    %2061 = vmatpush.bf16.msra.mxu0 %v1783
    %2062 = vmatpush.bf16.msra.mxu0 %v1778
    %2063 = vmatpush.bf16.msra.mxu0 %v1773
    %2064 = vmatpush.bf16.msra.mxu0 %v1768
    %2065 = vmatpush.bf16.msra.mxu0 %v1763
    %2066 = vmatpush.bf16.msra.mxu0 %v1758
    %2067 = vmatmul.bf16.gmra.mxu0 %v2039
    %v2068 = vpop.f32.mrf.mxu0
    %v2069 = vadd.f32 %v2056, %v2068
    %v2070 = vpop.f32.mrf.mxu0
    %2071 = vdwg.mxu0
    %2072 = vmatpush.bf16.msra.mxu0 %v1833
    %2073 = vmatpush.bf16.msra.mxu0 %v1828
    %2074 = vmatpush.bf16.msra.mxu0 %v1823
    %2075 = vmatpush.bf16.msra.mxu0 %v1818
    %2076 = vmatpush.bf16.msra.mxu0 %v1813
    %2077 = vmatpush.bf16.msra.mxu0 %v1808
    %2078 = vmatpush.bf16.msra.mxu0 %v1803
    %2079 = vmatpush.bf16.msra.mxu0 %v1798
    %2080 = vmatmul.bf16.gmra.mxu0 %v2040
    %v2081 = vpop.f32.mrf.mxu0
    %v2082 = vadd.f32 %v2069, %v2081
    %v2083 = vpop.f32.mrf.mxu0
    %2084 = vdwg.mxu0
    %2085 = vmatpush.bf16.msra.mxu0 %v1873
    %2086 = vmatpush.bf16.msra.mxu0 %v1868
    %2087 = vmatpush.bf16.msra.mxu0 %v1863
    %2088 = vmatpush.bf16.msra.mxu0 %v1858
    %2089 = vmatpush.bf16.msra.mxu0 %v1853
    %2090 = vmatpush.bf16.msra.mxu0 %v1848
    %2091 = vmatpush.bf16.msra.mxu0 %v1843
    %2092 = vmatpush.bf16.msra.mxu0 %v1838
    %2093 = vmatmul.bf16.gmra.mxu0 %v2041
    %v2094 = vpop.f32.mrf.mxu0
    %v2095 = vadd.f32 %v2082, %v2094
    %v2096 = vpop.f32.mrf.mxu0
    %2097 = vdwg.mxu0
    %2098 = vmatpush.bf16.msra.mxu0 %v1913
    %2099 = vmatpush.bf16.msra.mxu0 %v1908
    %2100 = vmatpush.bf16.msra.mxu0 %v1903
    %2101 = vmatpush.bf16.msra.mxu0 %v1898
    %2102 = vmatpush.bf16.msra.mxu0 %v1893
    %2103 = vmatpush.bf16.msra.mxu0 %v1888
    %2104 = vmatpush.bf16.msra.mxu0 %v1883
    %2105 = vmatpush.bf16.msra.mxu0 %v1878
    %2106 = vmatmul.bf16.gmra.mxu0 %v2042
    %v2107 = vpop.f32.mrf.mxu0
    %v2108 = vadd.f32 %v2095, %v2107
    %v2109 = vpop.f32.mrf.mxu0
    %2110 = vdwg.mxu0
    %2111 = vmatpush.bf16.msra.mxu0 %v1953
    %2112 = vmatpush.bf16.msra.mxu0 %v1948
    %2113 = vmatpush.bf16.msra.mxu0 %v1943
    %2114 = vmatpush.bf16.msra.mxu0 %v1938
    %2115 = vmatpush.bf16.msra.mxu0 %v1933
    %2116 = vmatpush.bf16.msra.mxu0 %v1928
    %2117 = vmatpush.bf16.msra.mxu0 %v1923
    %2118 = vmatpush.bf16.msra.mxu0 %v1918
    %2119 = vmatmul.bf16.gmra.mxu0 %v2043
    %v2120 = vpop.f32.mrf.mxu0
    %v2121 = vadd.f32 %v2108, %v2120
    %v2122 = vpop.f32.mrf.mxu0
    %2123 = vdwg.mxu0
    %2124 = vmatpush.bf16.msra.mxu0 %v1993
    %2125 = vmatpush.bf16.msra.mxu0 %v1988
    %2126 = vmatpush.bf16.msra.mxu0 %v1983
    %2127 = vmatpush.bf16.msra.mxu0 %v1978
    %2128 = vmatpush.bf16.msra.mxu0 %v1973
    %2129 = vmatpush.bf16.msra.mxu0 %v1968
    %2130 = vmatpush.bf16.msra.mxu0 %v1963
    %2131 = vmatpush.bf16.msra.mxu0 %v1958
    %2132 = vmatmul.bf16.gmra.mxu0 %v2044
    %v2133 = vpop.f32.mrf.mxu0
    %v2134 = vadd.f32 %v2121, %v2133
    %v2135 = vpop.f32.mrf.mxu0
    %2136 = vdwg.mxu0
    %2137 = vmatpush.bf16.msra.mxu0 %v2033
    %2138 = vmatpush.bf16.msra.mxu0 %v2028
    %2139 = vmatpush.bf16.msra.mxu0 %v2023
    %2140 = vmatpush.bf16.msra.mxu0 %v2018
    %2141 = vmatpush.bf16.msra.mxu0 %v2013
    %2142 = vmatpush.bf16.msra.mxu0 %v2008
    %2143 = vmatpush.bf16.msra.mxu0 %v2003
    %2144 = vmatpush.bf16.msra.mxu0 %v1998
    %2145 = vmatmul.bf16.gmra.mxu0 %v2045
    %v2146 = vpop.f32.mrf.mxu0
    %v2147 = vadd.f32 %v2134, %v2146
    %v2148 = vpop.f32.mrf.mxu0
    %2149 = vdwg.mxu0
    %2150 = vmatpush.bf16.msra.mxu0 %v1754
    %2151 = vmatpush.bf16.msra.mxu0 %v1749
    %2152 = vmatpush.bf16.msra.mxu0 %v1744
    %2153 = vmatpush.bf16.msra.mxu0 %v1739
    %2154 = vmatpush.bf16.msra.mxu0 %v1734
    %2155 = vmatpush.bf16.msra.mxu0 %v1729
    %2156 = vmatpush.bf16.msra.mxu0 %v1724
    %2157 = vmatpush.bf16.msra.mxu0 %v1719
    %2158 = vmatmul.bf16.gmra.mxu0 %v2038
    %v2159 = vpop.f32.mrf.mxu0
    %v2160 = vadd.f32 0.0, %v2159
    %v2161 = vpop.f32.mrf.mxu0
    %2162 = vdwg.mxu0
    %2163 = vmatpush.bf16.msra.mxu0 %v1794
    %2164 = vmatpush.bf16.msra.mxu0 %v1789
    %2165 = vmatpush.bf16.msra.mxu0 %v1784
    %2166 = vmatpush.bf16.msra.mxu0 %v1779
    %2167 = vmatpush.bf16.msra.mxu0 %v1774
    %2168 = vmatpush.bf16.msra.mxu0 %v1769
    %2169 = vmatpush.bf16.msra.mxu0 %v1764
    %2170 = vmatpush.bf16.msra.mxu0 %v1759
    %2171 = vmatmul.bf16.gmra.mxu0 %v2039
    %v2172 = vpop.f32.mrf.mxu0
    %v2173 = vadd.f32 %v2160, %v2172
    %v2174 = vpop.f32.mrf.mxu0
    %2175 = vdwg.mxu0
    %2176 = vmatpush.bf16.msra.mxu0 %v1834
    %2177 = vmatpush.bf16.msra.mxu0 %v1829
    %2178 = vmatpush.bf16.msra.mxu0 %v1824
    %2179 = vmatpush.bf16.msra.mxu0 %v1819
    %2180 = vmatpush.bf16.msra.mxu0 %v1814
    %2181 = vmatpush.bf16.msra.mxu0 %v1809
    %2182 = vmatpush.bf16.msra.mxu0 %v1804
    %2183 = vmatpush.bf16.msra.mxu0 %v1799
    %2184 = vmatmul.bf16.gmra.mxu0 %v2040
    %v2185 = vpop.f32.mrf.mxu0
    %v2186 = vadd.f32 %v2173, %v2185
    %v2187 = vpop.f32.mrf.mxu0
    %2188 = vdwg.mxu0
    %2189 = vmatpush.bf16.msra.mxu0 %v1874
    %2190 = vmatpush.bf16.msra.mxu0 %v1869
    %2191 = vmatpush.bf16.msra.mxu0 %v1864
    %2192 = vmatpush.bf16.msra.mxu0 %v1859
    %2193 = vmatpush.bf16.msra.mxu0 %v1854
    %2194 = vmatpush.bf16.msra.mxu0 %v1849
    %2195 = vmatpush.bf16.msra.mxu0 %v1844
    %2196 = vmatpush.bf16.msra.mxu0 %v1839
    %2197 = vmatmul.bf16.gmra.mxu0 %v2041
    %v2198 = vpop.f32.mrf.mxu0
    %v2199 = vadd.f32 %v2186, %v2198
    %v2200 = vpop.f32.mrf.mxu0
    %2201 = vdwg.mxu0
    %2202 = vmatpush.bf16.msra.mxu0 %v1914
    %2203 = vmatpush.bf16.msra.mxu0 %v1909
    %2204 = vmatpush.bf16.msra.mxu0 %v1904
    %2205 = vmatpush.bf16.msra.mxu0 %v1899
    %2206 = vmatpush.bf16.msra.mxu0 %v1894
    %2207 = vmatpush.bf16.msra.mxu0 %v1889
    %2208 = vmatpush.bf16.msra.mxu0 %v1884
    %2209 = vmatpush.bf16.msra.mxu0 %v1879
    %2210 = vmatmul.bf16.gmra.mxu0 %v2042
    %v2211 = vpop.f32.mrf.mxu0
    %v2212 = vadd.f32 %v2199, %v2211
    %v2213 = vpop.f32.mrf.mxu0
    %2214 = vdwg.mxu0
    %2215 = vmatpush.bf16.msra.mxu0 %v1954
    %2216 = vmatpush.bf16.msra.mxu0 %v1949
    %2217 = vmatpush.bf16.msra.mxu0 %v1944
    %2218 = vmatpush.bf16.msra.mxu0 %v1939
    %2219 = vmatpush.bf16.msra.mxu0 %v1934
    %2220 = vmatpush.bf16.msra.mxu0 %v1929
    %2221 = vmatpush.bf16.msra.mxu0 %v1924
    %2222 = vmatpush.bf16.msra.mxu0 %v1919
    %2223 = vmatmul.bf16.gmra.mxu0 %v2043
    %v2224 = vpop.f32.mrf.mxu0
    %v2225 = vadd.f32 %v2212, %v2224
    %v2226 = vpop.f32.mrf.mxu0
    %2227 = vdwg.mxu0
    %2228 = vmatpush.bf16.msra.mxu0 %v1994
    %2229 = vmatpush.bf16.msra.mxu0 %v1989
    %2230 = vmatpush.bf16.msra.mxu0 %v1984
    %2231 = vmatpush.bf16.msra.mxu0 %v1979
    %2232 = vmatpush.bf16.msra.mxu0 %v1974
    %2233 = vmatpush.bf16.msra.mxu0 %v1969
    %2234 = vmatpush.bf16.msra.mxu0 %v1964
    %2235 = vmatpush.bf16.msra.mxu0 %v1959
    %2236 = vmatmul.bf16.gmra.mxu0 %v2044
    %v2237 = vpop.f32.mrf.mxu0
    %v2238 = vadd.f32 %v2225, %v2237
    %v2239 = vpop.f32.mrf.mxu0
    %2240 = vdwg.mxu0
    %2241 = vmatpush.bf16.msra.mxu0 %v2034
    %2242 = vmatpush.bf16.msra.mxu0 %v2029
    %2243 = vmatpush.bf16.msra.mxu0 %v2024
    %2244 = vmatpush.bf16.msra.mxu0 %v2019
    %2245 = vmatpush.bf16.msra.mxu0 %v2014
    %2246 = vmatpush.bf16.msra.mxu0 %v2009
    %2247 = vmatpush.bf16.msra.mxu0 %v2004
    %2248 = vmatpush.bf16.msra.mxu0 %v1999
    %2249 = vmatmul.bf16.gmra.mxu0 %v2045
    %v2250 = vpop.f32.mrf.mxu0
    %v2251 = vadd.f32 %v2238, %v2250
    %v2252 = vpop.f32.mrf.mxu0
    %2253 = vdwg.mxu0
    %2254 = vmatpush.bf16.msra.mxu0 %v1755
    %2255 = vmatpush.bf16.msra.mxu0 %v1750
    %2256 = vmatpush.bf16.msra.mxu0 %v1745
    %2257 = vmatpush.bf16.msra.mxu0 %v1740
    %2258 = vmatpush.bf16.msra.mxu0 %v1735
    %2259 = vmatpush.bf16.msra.mxu0 %v1730
    %2260 = vmatpush.bf16.msra.mxu0 %v1725
    %2261 = vmatpush.bf16.msra.mxu0 %v1720
    %2262 = vmatmul.bf16.gmra.mxu0 %v2038
    %v2263 = vpop.f32.mrf.mxu0
    %v2264 = vadd.f32 0.0, %v2263
    %v2265 = vpop.f32.mrf.mxu0
    %2266 = vdwg.mxu0
    %2267 = vmatpush.bf16.msra.mxu0 %v1795
    %2268 = vmatpush.bf16.msra.mxu0 %v1790
    %2269 = vmatpush.bf16.msra.mxu0 %v1785
    %2270 = vmatpush.bf16.msra.mxu0 %v1780
    %2271 = vmatpush.bf16.msra.mxu0 %v1775
    %2272 = vmatpush.bf16.msra.mxu0 %v1770
    %2273 = vmatpush.bf16.msra.mxu0 %v1765
    %2274 = vmatpush.bf16.msra.mxu0 %v1760
    %2275 = vmatmul.bf16.gmra.mxu0 %v2039
    %v2276 = vpop.f32.mrf.mxu0
    %v2277 = vadd.f32 %v2264, %v2276
    %v2278 = vpop.f32.mrf.mxu0
    %2279 = vdwg.mxu0
    %2280 = vmatpush.bf16.msra.mxu0 %v1835
    %2281 = vmatpush.bf16.msra.mxu0 %v1830
    %2282 = vmatpush.bf16.msra.mxu0 %v1825
    %2283 = vmatpush.bf16.msra.mxu0 %v1820
    %2284 = vmatpush.bf16.msra.mxu0 %v1815
    %2285 = vmatpush.bf16.msra.mxu0 %v1810
    %2286 = vmatpush.bf16.msra.mxu0 %v1805
    %2287 = vmatpush.bf16.msra.mxu0 %v1800
    %2288 = vmatmul.bf16.gmra.mxu0 %v2040
    %v2289 = vpop.f32.mrf.mxu0
    %v2290 = vadd.f32 %v2277, %v2289
    %v2291 = vpop.f32.mrf.mxu0
    %2292 = vdwg.mxu0
    %2293 = vmatpush.bf16.msra.mxu0 %v1875
    %2294 = vmatpush.bf16.msra.mxu0 %v1870
    %2295 = vmatpush.bf16.msra.mxu0 %v1865
    %2296 = vmatpush.bf16.msra.mxu0 %v1860
    %2297 = vmatpush.bf16.msra.mxu0 %v1855
    %2298 = vmatpush.bf16.msra.mxu0 %v1850
    %2299 = vmatpush.bf16.msra.mxu0 %v1845
    %2300 = vmatpush.bf16.msra.mxu0 %v1840
    %2301 = vmatmul.bf16.gmra.mxu0 %v2041
    %v2302 = vpop.f32.mrf.mxu0
    %v2303 = vadd.f32 %v2290, %v2302
    %v2304 = vpop.f32.mrf.mxu0
    %2305 = vdwg.mxu0
    %2306 = vmatpush.bf16.msra.mxu0 %v1915
    %2307 = vmatpush.bf16.msra.mxu0 %v1910
    %2308 = vmatpush.bf16.msra.mxu0 %v1905
    %2309 = vmatpush.bf16.msra.mxu0 %v1900
    %2310 = vmatpush.bf16.msra.mxu0 %v1895
    %2311 = vmatpush.bf16.msra.mxu0 %v1890
    %2312 = vmatpush.bf16.msra.mxu0 %v1885
    %2313 = vmatpush.bf16.msra.mxu0 %v1880
    %2314 = vmatmul.bf16.gmra.mxu0 %v2042
    %v2315 = vpop.f32.mrf.mxu0
    %v2316 = vadd.f32 %v2303, %v2315
    %v2317 = vpop.f32.mrf.mxu0
    %2318 = vdwg.mxu0
    %2319 = vmatpush.bf16.msra.mxu0 %v1955
    %2320 = vmatpush.bf16.msra.mxu0 %v1950
    %2321 = vmatpush.bf16.msra.mxu0 %v1945
    %2322 = vmatpush.bf16.msra.mxu0 %v1940
    %2323 = vmatpush.bf16.msra.mxu0 %v1935
    %2324 = vmatpush.bf16.msra.mxu0 %v1930
    %2325 = vmatpush.bf16.msra.mxu0 %v1925
    %2326 = vmatpush.bf16.msra.mxu0 %v1920
    %2327 = vmatmul.bf16.gmra.mxu0 %v2043
    %v2328 = vpop.f32.mrf.mxu0
    %v2329 = vadd.f32 %v2316, %v2328
    %v2330 = vpop.f32.mrf.mxu0
    %2331 = vdwg.mxu0
    %2332 = vmatpush.bf16.msra.mxu0 %v1995
    %2333 = vmatpush.bf16.msra.mxu0 %v1990
    %2334 = vmatpush.bf16.msra.mxu0 %v1985
    %2335 = vmatpush.bf16.msra.mxu0 %v1980
    %2336 = vmatpush.bf16.msra.mxu0 %v1975
    %2337 = vmatpush.bf16.msra.mxu0 %v1970
    %2338 = vmatpush.bf16.msra.mxu0 %v1965
    %2339 = vmatpush.bf16.msra.mxu0 %v1960
    %2340 = vmatmul.bf16.gmra.mxu0 %v2044
    %v2341 = vpop.f32.mrf.mxu0
    %v2342 = vadd.f32 %v2329, %v2341
    %v2343 = vpop.f32.mrf.mxu0
    %2344 = vdwg.mxu0
    %2345 = vmatpush.bf16.msra.mxu0 %v2035
    %2346 = vmatpush.bf16.msra.mxu0 %v2030
    %2347 = vmatpush.bf16.msra.mxu0 %v2025
    %2348 = vmatpush.bf16.msra.mxu0 %v2020
    %2349 = vmatpush.bf16.msra.mxu0 %v2015
    %2350 = vmatpush.bf16.msra.mxu0 %v2010
    %2351 = vmatpush.bf16.msra.mxu0 %v2005
    %2352 = vmatpush.bf16.msra.mxu0 %v2000
    %2353 = vmatmul.bf16.gmra.mxu0 %v2045
    %v2354 = vpop.f32.mrf.mxu0
    %v2355 = vadd.f32 %v2342, %v2354
    %v2356 = vpop.f32.mrf.mxu0
    %2357 = vdwg.mxu0
    %2358 = vmatpush.bf16.msra.mxu0 %v1756
    %2359 = vmatpush.bf16.msra.mxu0 %v1751
    %2360 = vmatpush.bf16.msra.mxu0 %v1746
    %2361 = vmatpush.bf16.msra.mxu0 %v1741
    %2362 = vmatpush.bf16.msra.mxu0 %v1736
    %2363 = vmatpush.bf16.msra.mxu0 %v1731
    %2364 = vmatpush.bf16.msra.mxu0 %v1726
    %2365 = vmatpush.bf16.msra.mxu0 %v1721
    %2366 = vmatmul.bf16.gmra.mxu0 %v2038
    %v2367 = vpop.f32.mrf.mxu0
    %v2368 = vadd.f32 0.0, %v2367
    %v2369 = vpop.f32.mrf.mxu0
    %2370 = vdwg.mxu0
    %2371 = vmatpush.bf16.msra.mxu0 %v1796
    %2372 = vmatpush.bf16.msra.mxu0 %v1791
    %2373 = vmatpush.bf16.msra.mxu0 %v1786
    %2374 = vmatpush.bf16.msra.mxu0 %v1781
    %2375 = vmatpush.bf16.msra.mxu0 %v1776
    %2376 = vmatpush.bf16.msra.mxu0 %v1771
    %2377 = vmatpush.bf16.msra.mxu0 %v1766
    %2378 = vmatpush.bf16.msra.mxu0 %v1761
    %2379 = vmatmul.bf16.gmra.mxu0 %v2039
    %v2380 = vpop.f32.mrf.mxu0
    %v2381 = vadd.f32 %v2368, %v2380
    %v2382 = vpop.f32.mrf.mxu0
    %2383 = vdwg.mxu0
    %2384 = vmatpush.bf16.msra.mxu0 %v1836
    %2385 = vmatpush.bf16.msra.mxu0 %v1831
    %2386 = vmatpush.bf16.msra.mxu0 %v1826
    %2387 = vmatpush.bf16.msra.mxu0 %v1821
    %2388 = vmatpush.bf16.msra.mxu0 %v1816
    %2389 = vmatpush.bf16.msra.mxu0 %v1811
    %2390 = vmatpush.bf16.msra.mxu0 %v1806
    %2391 = vmatpush.bf16.msra.mxu0 %v1801
    %2392 = vmatmul.bf16.gmra.mxu0 %v2040
    %v2393 = vpop.f32.mrf.mxu0
    %v2394 = vadd.f32 %v2381, %v2393
    %v2395 = vpop.f32.mrf.mxu0
    %2396 = vdwg.mxu0
    %2397 = vmatpush.bf16.msra.mxu0 %v1876
    %2398 = vmatpush.bf16.msra.mxu0 %v1871
    %2399 = vmatpush.bf16.msra.mxu0 %v1866
    %2400 = vmatpush.bf16.msra.mxu0 %v1861
    %2401 = vmatpush.bf16.msra.mxu0 %v1856
    %2402 = vmatpush.bf16.msra.mxu0 %v1851
    %2403 = vmatpush.bf16.msra.mxu0 %v1846
    %2404 = vmatpush.bf16.msra.mxu0 %v1841
    %2405 = vmatmul.bf16.gmra.mxu0 %v2041
    %v2406 = vpop.f32.mrf.mxu0
    %v2407 = vadd.f32 %v2394, %v2406
    %v2408 = vpop.f32.mrf.mxu0
    %2409 = vdwg.mxu0
    %2410 = vmatpush.bf16.msra.mxu0 %v1916
    %2411 = vmatpush.bf16.msra.mxu0 %v1911
    %2412 = vmatpush.bf16.msra.mxu0 %v1906
    %2413 = vmatpush.bf16.msra.mxu0 %v1901
    %2414 = vmatpush.bf16.msra.mxu0 %v1896
    %2415 = vmatpush.bf16.msra.mxu0 %v1891
    %2416 = vmatpush.bf16.msra.mxu0 %v1886
    %2417 = vmatpush.bf16.msra.mxu0 %v1881
    %2418 = vmatmul.bf16.gmra.mxu0 %v2042
    %v2419 = vpop.f32.mrf.mxu0
    %v2420 = vadd.f32 %v2407, %v2419
    %v2421 = vpop.f32.mrf.mxu0
    %2422 = vdwg.mxu0
    %2423 = vmatpush.bf16.msra.mxu0 %v1956
    %2424 = vmatpush.bf16.msra.mxu0 %v1951
    %2425 = vmatpush.bf16.msra.mxu0 %v1946
    %2426 = vmatpush.bf16.msra.mxu0 %v1941
    %2427 = vmatpush.bf16.msra.mxu0 %v1936
    %2428 = vmatpush.bf16.msra.mxu0 %v1931
    %2429 = vmatpush.bf16.msra.mxu0 %v1926
    %2430 = vmatpush.bf16.msra.mxu0 %v1921
    %2431 = vmatmul.bf16.gmra.mxu0 %v2043
    %v2432 = vpop.f32.mrf.mxu0
    %v2433 = vadd.f32 %v2420, %v2432
    %v2434 = vpop.f32.mrf.mxu0
    %2435 = vdwg.mxu0
    %2436 = vmatpush.bf16.msra.mxu0 %v1996
    %2437 = vmatpush.bf16.msra.mxu0 %v1991
    %2438 = vmatpush.bf16.msra.mxu0 %v1986
    %2439 = vmatpush.bf16.msra.mxu0 %v1981
    %2440 = vmatpush.bf16.msra.mxu0 %v1976
    %2441 = vmatpush.bf16.msra.mxu0 %v1971
    %2442 = vmatpush.bf16.msra.mxu0 %v1966
    %2443 = vmatpush.bf16.msra.mxu0 %v1961
    %2444 = vmatmul.bf16.gmra.mxu0 %v2044
    %v2445 = vpop.f32.mrf.mxu0
    %v2446 = vadd.f32 %v2433, %v2445
    %v2447 = vpop.f32.mrf.mxu0
    %2448 = vdwg.mxu0
    %2449 = vmatpush.bf16.msra.mxu0 %v2036
    %2450 = vmatpush.bf16.msra.mxu0 %v2031
    %2451 = vmatpush.bf16.msra.mxu0 %v2026
    %2452 = vmatpush.bf16.msra.mxu0 %v2021
    %2453 = vmatpush.bf16.msra.mxu0 %v2016
    %2454 = vmatpush.bf16.msra.mxu0 %v2011
    %2455 = vmatpush.bf16.msra.mxu0 %v2006
    %2456 = vmatpush.bf16.msra.mxu0 %v2001
    %2457 = vmatmul.bf16.gmra.mxu0 %v2045
    %v2458 = vpop.f32.mrf.mxu0
    %v2459 = vadd.f32 %v2446, %v2458
    %v2460 = vpop.f32.mrf.mxu0
    %2461 = vdwg.mxu0
    %2462 = vmatpush.bf16.msra.mxu0 %v1757
    %2463 = vmatpush.bf16.msra.mxu0 %v1752
    %2464 = vmatpush.bf16.msra.mxu0 %v1747
    %2465 = vmatpush.bf16.msra.mxu0 %v1742
    %2466 = vmatpush.bf16.msra.mxu0 %v1737
    %2467 = vmatpush.bf16.msra.mxu0 %v1732
    %2468 = vmatpush.bf16.msra.mxu0 %v1727
    %2469 = vmatpush.bf16.msra.mxu0 %v1722
    %2470 = vmatmul.bf16.gmra.mxu0 %v2038
    %v2471 = vpop.f32.mrf.mxu0
    %v2472 = vadd.f32 0.0, %v2471
    %v2473 = vpop.f32.mrf.mxu0
    %2474 = vdwg.mxu0
    %2475 = vmatpush.bf16.msra.mxu0 %v1797
    %2476 = vmatpush.bf16.msra.mxu0 %v1792
    %2477 = vmatpush.bf16.msra.mxu0 %v1787
    %2478 = vmatpush.bf16.msra.mxu0 %v1782
    %2479 = vmatpush.bf16.msra.mxu0 %v1777
    %2480 = vmatpush.bf16.msra.mxu0 %v1772
    %2481 = vmatpush.bf16.msra.mxu0 %v1767
    %2482 = vmatpush.bf16.msra.mxu0 %v1762
    %2483 = vmatmul.bf16.gmra.mxu0 %v2039
    %v2484 = vpop.f32.mrf.mxu0
    %v2485 = vadd.f32 %v2472, %v2484
    %v2486 = vpop.f32.mrf.mxu0
    %2487 = vdwg.mxu0
    %2488 = vmatpush.bf16.msra.mxu0 %v1837
    %2489 = vmatpush.bf16.msra.mxu0 %v1832
    %2490 = vmatpush.bf16.msra.mxu0 %v1827
    %2491 = vmatpush.bf16.msra.mxu0 %v1822
    %2492 = vmatpush.bf16.msra.mxu0 %v1817
    %2493 = vmatpush.bf16.msra.mxu0 %v1812
    %2494 = vmatpush.bf16.msra.mxu0 %v1807
    %2495 = vmatpush.bf16.msra.mxu0 %v1802
    %2496 = vmatmul.bf16.gmra.mxu0 %v2040
    %v2497 = vpop.f32.mrf.mxu0
    %v2498 = vadd.f32 %v2485, %v2497
    %v2499 = vpop.f32.mrf.mxu0
    %2500 = vdwg.mxu0
    %2501 = vmatpush.bf16.msra.mxu0 %v1877
    %2502 = vmatpush.bf16.msra.mxu0 %v1872
    %2503 = vmatpush.bf16.msra.mxu0 %v1867
    %2504 = vmatpush.bf16.msra.mxu0 %v1862
    %2505 = vmatpush.bf16.msra.mxu0 %v1857
    %2506 = vmatpush.bf16.msra.mxu0 %v1852
    %2507 = vmatpush.bf16.msra.mxu0 %v1847
    %2508 = vmatpush.bf16.msra.mxu0 %v1842
    %2509 = vmatmul.bf16.gmra.mxu0 %v2041
    %v2510 = vpop.f32.mrf.mxu0
    %v2511 = vadd.f32 %v2498, %v2510
    %v2512 = vpop.f32.mrf.mxu0
    %2513 = vdwg.mxu0
    %2514 = vmatpush.bf16.msra.mxu0 %v1917
    %2515 = vmatpush.bf16.msra.mxu0 %v1912
    %2516 = vmatpush.bf16.msra.mxu0 %v1907
    %2517 = vmatpush.bf16.msra.mxu0 %v1902
    %2518 = vmatpush.bf16.msra.mxu0 %v1897
    %2519 = vmatpush.bf16.msra.mxu0 %v1892
    %2520 = vmatpush.bf16.msra.mxu0 %v1887
    %2521 = vmatpush.bf16.msra.mxu0 %v1882
    %2522 = vmatmul.bf16.gmra.mxu0 %v2042
    %v2523 = vpop.f32.mrf.mxu0
    %v2524 = vadd.f32 %v2511, %v2523
    %v2525 = vpop.f32.mrf.mxu0
    %2526 = vdwg.mxu0
    %2527 = vmatpush.bf16.msra.mxu0 %v1957
    %2528 = vmatpush.bf16.msra.mxu0 %v1952
    %2529 = vmatpush.bf16.msra.mxu0 %v1947
    %2530 = vmatpush.bf16.msra.mxu0 %v1942
    %2531 = vmatpush.bf16.msra.mxu0 %v1937
    %2532 = vmatpush.bf16.msra.mxu0 %v1932
    %2533 = vmatpush.bf16.msra.mxu0 %v1927
    %2534 = vmatpush.bf16.msra.mxu0 %v1922
    %2535 = vmatmul.bf16.gmra.mxu0 %v2043
    %v2536 = vpop.f32.mrf.mxu0
    %v2537 = vadd.f32 %v2524, %v2536
    %v2538 = vpop.f32.mrf.mxu0
    %2539 = vdwg.mxu0
    %2540 = vmatpush.bf16.msra.mxu0 %v1997
    %2541 = vmatpush.bf16.msra.mxu0 %v1992
    %2542 = vmatpush.bf16.msra.mxu0 %v1987
    %2543 = vmatpush.bf16.msra.mxu0 %v1982
    %2544 = vmatpush.bf16.msra.mxu0 %v1977
    %2545 = vmatpush.bf16.msra.mxu0 %v1972
    %2546 = vmatpush.bf16.msra.mxu0 %v1967
    %2547 = vmatpush.bf16.msra.mxu0 %v1962
    %2548 = vmatmul.bf16.gmra.mxu0 %v2044
    %v2549 = vpop.f32.mrf.mxu0
    %v2550 = vadd.f32 %v2537, %v2549
    %v2551 = vpop.f32.mrf.mxu0
    %2552 = vdwg.mxu0
    %2553 = vmatpush.bf16.msra.mxu0 %v2037
    %2554 = vmatpush.bf16.msra.mxu0 %v2032
    %2555 = vmatpush.bf16.msra.mxu0 %v2027
    %2556 = vmatpush.bf16.msra.mxu0 %v2022
    %2557 = vmatpush.bf16.msra.mxu0 %v2017
    %2558 = vmatpush.bf16.msra.mxu0 %v2012
    %2559 = vmatpush.bf16.msra.mxu0 %v2007
    %2560 = vmatpush.bf16.msra.mxu0 %v2002
    %2561 = vmatmul.bf16.gmra.mxu0 %v2045
    %v2562 = vpop.f32.mrf.mxu0
    %v2563 = vadd.f32 %v2550, %v2562
    %v2564 = vpop.f32.mrf.mxu0
    %2565 = vdwg.mxu0
    %v2566 = vld [vmem:[%s4] sm:$0x1f]
    %v2568 = vperm.slane %v2566, 0
    %v2569 = vperm.slane %v2566, 1
    %v2570 = vperm.slane %v2566, 2
    %v2571 = vperm.slane %v2566, 3
    %v2572 = vperm.slane %v2566, 4
    %v2578 = vmul.f32 %v2147, %v2568
    %v2579 = vmul.f32 %v2251, %v2569
    %v2580 = vmul.f32 %v2355, %v2570
    %v2581 = vmul.f32 %v2459, %v2571
    %v2582 = vmul.f32 %v2563, %v2572
    %v2583 = vld [vmem:[%s5] sm:$0x1f]
    %v2585 = vperm.slane %v2583, 0
    %v2586 = vperm.slane %v2583, 1
    %v2587 = vperm.slane %v2583, 2
    %v2588 = vperm.slane %v2583, 3
    %v2589 = vperm.slane %v2583, 4
    %v2595 = vadd.f32 %v2578, %v2585
    %v2596 = vadd.f32 %v2579, %v2586
    %v2597 = vadd.f32 %v2580, %v2587
    %v2598 = vadd.f32 %v2581, %v2588
    %v2599 = vadd.f32 %v2582, %v2589
    %v2600 = vmax.f32 %v2595, 0.0
    %v2601 = vmax.f32 %v2596, 0.0
    %v2602 = vmax.f32 %v2597, 0.0
    %v2603 = vmax.f32 %v2598, 0.0
    %v2604 = vmax.f32 %v2599, 0.0
    %v2605 = vpack.c.bf16 %v2600, %v2600
    %v2606 = vpack.c.bf16 %v2601, %v2601
    %v2607 = vpack.c.bf16 %v2602, %v2602
    %v2608 = vpack.c.bf16 %v2603, %v2603
    %v2609 = vpack.c.bf16 %v2604, %v2604
    %v2610 = vld [vmem:[%s6] sm:$0xf]
    %v2611 = vld [vmem:[%s6 + $0x4] sm:$0xf]
    %v2612 = vld [vmem:[%s6 + $0x8] sm:$0xf]
    %v2613 = vld [vmem:[%s6 + $0xc] sm:$0xf]
    %v2614 = vld [vmem:[%s6 + $0x10] sm:$0xf]
    %v2615 = vld [vmem:[%s6 + $0x14] sm:$0xf]
    %v2616 = vld [vmem:[%s6 + $0x18] sm:$0xf]
    %v2617 = vld [vmem:[%s6 + $0x1c] sm:$0xf]
    %v2618 = vld [vmem:[%s6 + $0x20] sm:$0xf]
    %v2619 = vld [vmem:[%s6 + $0x24] sm:$0xf]
    %v2620 = vld [vmem:[%s6 + $0x28] sm:$0xf]
    %v2621 = vld [vmem:[%s6 + $0x2c] sm:$0xf]
    %v2622 = vld [vmem:[%s6 + $0x30] sm:$0xf]
    %v2623 = vld [vmem:[%s6 + $0x34] sm:$0xf]
    %v2624 = vld [vmem:[%s6 + $0x38] sm:$0xf]
    %v2625 = vld [vmem:[%s6 + $0x3c] sm:$0xf]
    %v2626 = vld [vmem:[%s6 + $0x40] sm:$0xf]
    %v2627 = vld [vmem:[%s6 + $0x44] sm:$0xf]
    %v2628 = vld [vmem:[%s6 + $0x48] sm:$0xf]
    %v2629 = vld [vmem:[%s6 + $0x4c] sm:$0xf]
    %v2630 = vld [vmem:[%s6 + $0x50] sm:$0xf]
    %v2631 = vld [vmem:[%s6 + $0x54] sm:$0xf]
    %v2632 = vld [vmem:[%s6 + $0x58] sm:$0xf]
    %v2633 = vld [vmem:[%s6 + $0x5c] sm:$0xf]
    %v2634 = vld [vmem:[%s6 + $0x60] sm:$0xf]
    %v2635 = vld [vmem:[%s6 + $0x64] sm:$0xf]
    %v2636 = vld [vmem:[%s6 + $0x68] sm:$0xf]
    %v2637 = vld [vmem:[%s6 + $0x6c] sm:$0xf]
    %v2638 = vld [vmem:[%s6 + $0x70] sm:$0xf]
    %v2639 = vld [vmem:[%s6 + $0x74] sm:$0xf]
    %v2640 = vld [vmem:[%s6 + $0x78] sm:$0xf]
    %v2641 = vld [vmem:[%s6 + $0x7c] sm:$0xf]
    %v2642 = vld [vmem:[%s6 + $0x80] sm:$0xf]
    %v2643 = vld [vmem:[%s6 + $0x84] sm:$0xf]
    %v2644 = vld [vmem:[%s6 + $0x88] sm:$0xf]
    %v2645 = vld [vmem:[%s6 + $0x8c] sm:$0xf]
    %v2646 = vld [vmem:[%s6 + $0x90] sm:$0xf]
    %v2647 = vld [vmem:[%s6 + $0x94] sm:$0xf]
    %v2648 = vld [vmem:[%s6 + $0x98] sm:$0xf]
    %v2649 = vld [vmem:[%s6 + $0x9c] sm:$0xf]
    %v2650 = vld [vmem:[%s6 + $0xa0] sm:$0xf]
    %v2651 = vld [vmem:[%s6 + $0xa4] sm:$0xf]
    %v2652 = vld [vmem:[%s6 + $0xa8] sm:$0xf]
    %v2653 = vld [vmem:[%s6 + $0xac] sm:$0xf]
    %v2654 = vld [vmem:[%s6 + $0xb0] sm:$0xf]
    %v2655 = vld [vmem:[%s6 + $0xb4] sm:$0xf]
    %v2656 = vld [vmem:[%s6 + $0xb8] sm:$0xf]
    %v2657 = vld [vmem:[%s6 + $0xbc] sm:$0xf]
    %v2658 = vld [vmem:[%s6 + $0xc0] sm:$0xf]
    %v2659 = vld [vmem:[%s6 + $0xc4] sm:$0xf]
    %v2660 = vld [vmem:[%s6 + $0xc8] sm:$0xf]
    %v2661 = vld [vmem:[%s6 + $0xcc] sm:$0xf]
    %v2662 = vld [vmem:[%s6 + $0xd0] sm:$0xf]
    %v2663 = vld [vmem:[%s6 + $0xd4] sm:$0xf]
    %v2664 = vld [vmem:[%s6 + $0xd8] sm:$0xf]
    %v2665 = vld [vmem:[%s6 + $0xdc] sm:$0xf]
    %v2666 = vld [vmem:[%s6 + $0xe0] sm:$0xf]
    %v2667 = vld [vmem:[%s6 + $0xe4] sm:$0xf]
    %v2668 = vld [vmem:[%s6 + $0xe8] sm:$0xf]
    %v2669 = vld [vmem:[%s6 + $0xec] sm:$0xf]
    %v2670 = vld [vmem:[%s6 + $0xf0] sm:$0xf]
    %v2671 = vld [vmem:[%s6 + $0xf4] sm:$0xf]
    %v2672 = vld [vmem:[%s6 + $0xf8] sm:$0xf]
    %v2673 = vld [vmem:[%s6 + $0xfc] sm:$0xf]
    %v2674 = vld [vmem:[%s6 + $0x100] sm:$0xf]
    %v2675 = vld [vmem:[%s6 + $0x104] sm:$0xf]
    %v2676 = vld [vmem:[%s6 + $0x108] sm:$0xf]
    %v2677 = vld [vmem:[%s6 + $0x10c] sm:$0xf]
    %v2678 = vld [vmem:[%s6 + $0x110] sm:$0xf]
    %v2679 = vld [vmem:[%s6 + $0x114] sm:$0xf]
    %v2680 = vld [vmem:[%s6 + $0x118] sm:$0xf]
    %v2681 = vld [vmem:[%s6 + $0x11c] sm:$0xf]
    %v2682 = vld [vmem:[%s6 + $0x120] sm:$0xf]
    %v2683 = vld [vmem:[%s6 + $0x124] sm:$0xf]
    %v2684 = vld [vmem:[%s6 + $0x128] sm:$0xf]
    %v2685 = vld [vmem:[%s6 + $0x12c] sm:$0xf]
    %v2686 = vld [vmem:[%s6 + $0x130] sm:$0xf]
    %v2687 = vld [vmem:[%s6 + $0x134] sm:$0xf]
    %v2688 = vld [vmem:[%s6 + $0x138] sm:$0xf]
    %v2689 = vld [vmem:[%s6 + $0x13c] sm:$0xf]
    %v2690 = vld [vmem:[%s7] sm:$0x1]
    %v2692 = vperm.slane %v2690, 0
    %v2774 = vunpack.c.l.b16 %v2610
    %v2775 = vunpack.c.l.b16 %v2611
    %v2776 = vunpack.c.l.b16 %v2612
    %v2777 = vunpack.c.l.b16 %v2613
    %v2778 = vunpack.c.l.b16 %v2614
    %v2779 = vunpack.c.l.b16 %v2615
    %v2780 = vunpack.c.l.b16 %v2616
    %v2781 = vunpack.c.l.b16 %v2617
    %v2782 = vunpack.c.l.b16 %v2618
    %v2783 = vunpack.c.l.b16 %v2619
    %v2784 = vunpack.c.l.b16 %v2620
    %v2785 = vunpack.c.l.b16 %v2621
    %v2786 = vunpack.c.l.b16 %v2622
    %v2787 = vunpack.c.l.b16 %v2623
    %v2788 = vunpack.c.l.b16 %v2624
    %v2789 = vunpack.c.l.b16 %v2625
    %v2790 = vunpack.c.l.b16 %v2626
    %v2791 = vunpack.c.l.b16 %v2627
    %v2792 = vunpack.c.l.b16 %v2628
    %v2793 = vunpack.c.l.b16 %v2629
    %v2794 = vunpack.c.l.b16 %v2630
    %v2795 = vunpack.c.l.b16 %v2631
    %v2796 = vunpack.c.l.b16 %v2632
    %v2797 = vunpack.c.l.b16 %v2633
    %v2798 = vunpack.c.l.b16 %v2634
    %v2799 = vunpack.c.l.b16 %v2635
    %v2800 = vunpack.c.l.b16 %v2636
    %v2801 = vunpack.c.l.b16 %v2637
    %v2802 = vunpack.c.l.b16 %v2638
    %v2803 = vunpack.c.l.b16 %v2639
    %v2804 = vunpack.c.l.b16 %v2640
    %v2805 = vunpack.c.l.b16 %v2641
    %v2806 = vunpack.c.l.b16 %v2642
    %v2807 = vunpack.c.l.b16 %v2643
    %v2808 = vunpack.c.l.b16 %v2644
    %v2809 = vunpack.c.l.b16 %v2645
    %v2810 = vunpack.c.l.b16 %v2646
    %v2811 = vunpack.c.l.b16 %v2647
    %v2812 = vunpack.c.l.b16 %v2648
    %v2813 = vunpack.c.l.b16 %v2649
    %v2814 = vunpack.c.l.b16 %v2650
    %v2815 = vunpack.c.l.b16 %v2651
    %v2816 = vunpack.c.l.b16 %v2652
    %v2817 = vunpack.c.l.b16 %v2653
    %v2818 = vunpack.c.l.b16 %v2654
    %v2819 = vunpack.c.l.b16 %v2655
    %v2820 = vunpack.c.l.b16 %v2656
    %v2821 = vunpack.c.l.b16 %v2657
    %v2822 = vunpack.c.l.b16 %v2658
    %v2823 = vunpack.c.l.b16 %v2659
    %v2824 = vunpack.c.l.b16 %v2660
    %v2825 = vunpack.c.l.b16 %v2661
    %v2826 = vunpack.c.l.b16 %v2662
    %v2827 = vunpack.c.l.b16 %v2663
    %v2828 = vunpack.c.l.b16 %v2664
    %v2829 = vunpack.c.l.b16 %v2665
    %v2830 = vunpack.c.l.b16 %v2666
    %v2831 = vunpack.c.l.b16 %v2667
    %v2832 = vunpack.c.l.b16 %v2668
    %v2833 = vunpack.c.l.b16 %v2669
    %v2834 = vunpack.c.l.b16 %v2670
    %v2835 = vunpack.c.l.b16 %v2671
    %v2836 = vunpack.c.l.b16 %v2672
    %v2837 = vunpack.c.l.b16 %v2673
    %v2838 = vunpack.c.l.b16 %v2674
    %v2839 = vunpack.c.l.b16 %v2675
    %v2840 = vunpack.c.l.b16 %v2676
    %v2841 = vunpack.c.l.b16 %v2677
    %v2842 = vunpack.c.l.b16 %v2678
    %v2843 = vunpack.c.l.b16 %v2679
    %v2844 = vunpack.c.l.b16 %v2680
    %v2845 = vunpack.c.l.b16 %v2681
    %v2846 = vunpack.c.l.b16 %v2682
    %v2847 = vunpack.c.l.b16 %v2683
    %v2848 = vunpack.c.l.b16 %v2684
    %v2849 = vunpack.c.l.b16 %v2685
    %v2850 = vunpack.c.l.b16 %v2686
    %v2851 = vunpack.c.l.b16 %v2687
    %v2852 = vunpack.c.l.b16 %v2688
    %v2853 = vunpack.c.l.b16 %v2689
    %v2854 = vpack.c.b16 %v2775, %v2774
    %v2855 = vpack.c.b16 %v2777, %v2776
    %v2856 = vpack.c.b16 %v2779, %v2778
    %v2857 = vpack.c.b16 %v2781, %v2780
    %v2858 = vpack.c.b16 %v2783, %v2782
    %v2859 = vpack.c.b16 %v2785, %v2784
    %v2860 = vpack.c.b16 %v2787, %v2786
    %v2861 = vpack.c.b16 %v2789, %v2788
    %v2862 = vpack.c.b16 %v2791, %v2790
    %v2863 = vpack.c.b16 %v2793, %v2792
    %v2864 = vpack.c.b16 %v2795, %v2794
    %v2865 = vpack.c.b16 %v2797, %v2796
    %v2866 = vpack.c.b16 %v2799, %v2798
    %v2867 = vpack.c.b16 %v2801, %v2800
    %v2868 = vpack.c.b16 %v2803, %v2802
    %v2869 = vpack.c.b16 %v2805, %v2804
    %v2870 = vpack.c.b16 %v2807, %v2806
    %v2871 = vpack.c.b16 %v2809, %v2808
    %v2872 = vpack.c.b16 %v2811, %v2810
    %v2873 = vpack.c.b16 %v2813, %v2812
    %v2874 = vpack.c.b16 %v2815, %v2814
    %v2875 = vpack.c.b16 %v2817, %v2816
    %v2876 = vpack.c.b16 %v2819, %v2818
    %v2877 = vpack.c.b16 %v2821, %v2820
    %v2878 = vpack.c.b16 %v2823, %v2822
    %v2879 = vpack.c.b16 %v2825, %v2824
    %v2880 = vpack.c.b16 %v2827, %v2826
    %v2881 = vpack.c.b16 %v2829, %v2828
    %v2882 = vpack.c.b16 %v2831, %v2830
    %v2883 = vpack.c.b16 %v2833, %v2832
    %v2884 = vpack.c.b16 %v2835, %v2834
    %v2885 = vpack.c.b16 %v2837, %v2836
    %v2886 = vpack.c.b16 %v2839, %v2838
    %v2887 = vpack.c.b16 %v2841, %v2840
    %v2888 = vpack.c.b16 %v2843, %v2842
    %v2889 = vpack.c.b16 %v2845, %v2844
    %v2890 = vpack.c.b16 %v2847, %v2846
    %v2891 = vpack.c.b16 %v2849, %v2848
    %v2892 = vpack.c.b16 %v2851, %v2850
    %v2893 = vpack.c.b16 %v2853, %v2852
    %2934 = vmatpush.bf16.msra.mxu0 %v2861
    %2935 = vmatpush.bf16.msra.mxu0 %v2860
    %2936 = vmatpush.bf16.msra.mxu0 %v2859
    %2937 = vmatpush.bf16.msra.mxu0 %v2858
    %2938 = vmatpush.bf16.msra.mxu0 %v2857
    %2939 = vmatpush.bf16.msra.mxu0 %v2856
    %2940 = vmatpush.bf16.msra.mxu0 %v2855
    %2941 = vmatpush.bf16.msra.mxu0 %v2854
    %2942 = vmatmul.bf16.gmra.mxu0 %v2605
    %v2943 = vpop.f32.mrf.mxu0
    %v2944 = vadd.f32 %v2692, %v2943
    %v2945 = vpop.f32.mrf.mxu0
    %2946 = vdwg.mxu0
    %2947 = vmatpush.bf16.msra.mxu0 %v2869
    %2948 = vmatpush.bf16.msra.mxu0 %v2868
    %2949 = vmatpush.bf16.msra.mxu0 %v2867
    %2950 = vmatpush.bf16.msra.mxu0 %v2866
    %2951 = vmatpush.bf16.msra.mxu0 %v2865
    %2952 = vmatpush.bf16.msra.mxu0 %v2864
    %2953 = vmatpush.bf16.msra.mxu0 %v2863
    %2954 = vmatpush.bf16.msra.mxu0 %v2862
    %2955 = vmatmul.bf16.gmra.mxu0 %v2606
    %v2956 = vpop.f32.mrf.mxu0
    %v2957 = vadd.f32 %v2944, %v2956
    %v2958 = vpop.f32.mrf.mxu0
    %2959 = vdwg.mxu0
    %2960 = vmatpush.bf16.msra.mxu0 %v2877
    %2961 = vmatpush.bf16.msra.mxu0 %v2876
    %2962 = vmatpush.bf16.msra.mxu0 %v2875
    %2963 = vmatpush.bf16.msra.mxu0 %v2874
    %2964 = vmatpush.bf16.msra.mxu0 %v2873
    %2965 = vmatpush.bf16.msra.mxu0 %v2872
    %2966 = vmatpush.bf16.msra.mxu0 %v2871
    %2967 = vmatpush.bf16.msra.mxu0 %v2870
    %2968 = vmatmul.bf16.gmra.mxu0 %v2607
    %v2969 = vpop.f32.mrf.mxu0
    %v2970 = vadd.f32 %v2957, %v2969
    %v2971 = vpop.f32.mrf.mxu0
    %2972 = vdwg.mxu0
    %2973 = vmatpush.bf16.msra.mxu0 %v2885
    %2974 = vmatpush.bf16.msra.mxu0 %v2884
    %2975 = vmatpush.bf16.msra.mxu0 %v2883
    %2976 = vmatpush.bf16.msra.mxu0 %v2882
    %2977 = vmatpush.bf16.msra.mxu0 %v2881
    %2978 = vmatpush.bf16.msra.mxu0 %v2880
    %2979 = vmatpush.bf16.msra.mxu0 %v2879
    %2980 = vmatpush.bf16.msra.mxu0 %v2878
    %2981 = vmatmul.bf16.gmra.mxu0 %v2608
    %v2982 = vpop.f32.mrf.mxu0
    %v2983 = vadd.f32 %v2970, %v2982
    %v2984 = vpop.f32.mrf.mxu0
    %2985 = vdwg.mxu0
    %2986 = vmatpush.bf16.msra.mxu0 %v2893
    %2987 = vmatpush.bf16.msra.mxu0 %v2892
    %2988 = vmatpush.bf16.msra.mxu0 %v2891
    %2989 = vmatpush.bf16.msra.mxu0 %v2890
    %2990 = vmatpush.bf16.msra.mxu0 %v2889
    %2991 = vmatpush.bf16.msra.mxu0 %v2888
    %2992 = vmatpush.bf16.msra.mxu0 %v2887
    %2993 = vmatpush.bf16.msra.mxu0 %v2886
    %2994 = vmatmul.bf16.gmra.mxu0 %v2609
    %v2995 = vpop.f32.mrf.mxu0
    %v2996 = vadd.f32 %v2983, %v2995
    %v2997 = vpop.f32.mrf.mxu0
    %2998 = vdwg.mxu0
    %vm2999 = vcmask 31744
    %3000 = vst.msk [vmem:[%s8] sm:$0xff] %vm2999, %v2996
    // Predicated region
    $region38: #{tpu_custom_call.1} parent=1 // pred_check
      _
    $region39: #{tpu_custom_call.1} parent=1 // pred_check_branch
      %3002 = sbr.rel (0) target = $region41
    $region40: #{tpu_custom_call.1} parent=1 // pred_region
      _
    $region41: #{tpu_custom_call.1} parent=1 // pred_fallthru
      _
    // Predicated region
    $region42: #{tpu_custom_call.1} parent=1 // pred_check
      _
    $region43: #{tpu_custom_call.1} parent=1 // pred_check_branch
      %3004 = sbr.rel (0) target = $region45
    $region44: #{tpu_custom_call.1} parent=1 // pred_region
      _
    $region45: #{tpu_custom_call.1} parent=1 // pred_fallthru
      _
    %3005 = vsyncpa [#allocation3], 1

</llo_original>
